<compile_context>
chip_gen: v7x
topology: tpu7x:2x2x1
jax: 0.10.0
libtpu: 0.0.40
codegen_flags: <defaults>
</compile_context>

<pallas_src>
import numpy as np
import jax
import jax.numpy as jnp
from jax.experimental import pallas as pl
from jax.experimental.pallas import tpu as pltpu


def _round_up(x, m):
    return ((x + m - 1) // m) * m


def _pad_out(d):
    # Padded lane width for MLP output / feature channels.
    return 64 if d <= 64 else _round_up(d, 128)


# ----------------------------------------------------------------------------
# VMEM capacity (per-generation tile budgets: v5e/v6e 128 MiB, v7x 64 MiB)
# ----------------------------------------------------------------------------
_VMEM_CAP = None


def _vmem_cap():
    global _VMEM_CAP
    if _VMEM_CAP is None:
        try:
            cap = int(pltpu.get_tpu_info().vmem_capacity_bytes)
            _VMEM_CAP = min(max(cap, 32 << 20), 256 << 20)
        except Exception:
            _VMEM_CAP = 64 << 20  # conservative fallback (v7x per-TC)
    return _VMEM_CAP


# ----------------------------------------------------------------------------
# Parameter init (PyTorch-style uniform(-1/sqrt(fan_in), +1/sqrt(fan_in))).
# Weights padded + cast to bf16 ONCE here; biases f32.
# ----------------------------------------------------------------------------
def _init_linear(key, din, dout):
    kw, kb = jax.random.split(key)
    bound = 1.0 / float(np.sqrt(din))
    w = jax.random.uniform(kw, (din, dout), jnp.float32, -bound, bound)
    b = jax.random.uniform(kb, (dout,), jnp.float32, -bound, bound)
    kpad, npad = _pad_out(din), _pad_out(dout)
    wp = jnp.zeros((kpad, npad), jnp.float32).at[:din, :dout].set(w).astype(jnp.bfloat16)
    bp = jnp.zeros((1, npad), jnp.float32).at[0, :dout].set(b)
    return {"w": wp, "b": bp, "din": din, "dout": dout}


def _init_mlp(key, dims):
    layers = []
    dims = tuple(dims)
    for i in range(1, len(dims)):
        key, sub = jax.random.split(key)
        layers.append(_init_linear(sub, dims[i - 1], dims[i]))
    return layers


def _init_split_first(key, feat_dim, feat_pad, dout):
    # First in_mlp layer of a BasicBlock: Linear(feat_dim + 3, dout) split into
    # W_feat (feat_pad, dout_pad) and W_rel (8, dout_pad) with a shared bias.
    din = feat_dim + 3
    kw, kb = jax.random.split(key)
    bound = 1.0 / float(np.sqrt(din))
    w = jax.random.uniform(kw, (din, dout), jnp.float32, -bound, bound)
    b = jax.random.uniform(kb, (dout,), jnp.float32, -bound, bound)
    npad = _pad_out(dout)
    wf = (jnp.zeros((feat_pad, npad), jnp.float32)
          .at[:feat_dim, :dout].set(w[:feat_dim]).astype(jnp.bfloat16))
    wr = (jnp.zeros((8, npad), jnp.float32)
          .at[:3, :dout].set(w[feat_dim:]).astype(jnp.bfloat16))
    bp = jnp.zeros((1, npad), jnp.float32).at[0, :dout].set(b)
    return wf, wr, bp


def _init_block(key, in_dims, out_dims, feat_pad, before_dims=None, after_dims=None):
    k = jax.random.split(key, 5)
    feat_dim = in_dims[0] - 3
    wf, wr, b1 = _init_split_first(k[0], feat_dim, feat_pad, in_dims[1])
    in_rest = _init_mlp(k[1], in_dims[1:])
    out = _init_mlp(k[2], out_dims)
    before = _init_mlp(k[3], before_dims) if before_dims else []
    after = _init_mlp(k[4], after_dims) if after_dims else []
    last = (after if after else out)[-1]
    return {"wf": wf, "wr": wr, "b1": b1, "in_rest": in_rest, "out": out,
            "before": before, "after": after,
            "out_dim": int(last["dout"]), "final_pad": int(last["w"].shape[1])}


def hgnn_init(key):
    ks = iter(jax.random.split(key, 16))
    nk = lambda: next(ks)
    return {
        "downsample1": _init_block(nk(), (7, 32, 64), (64, 64), feat_pad=8),
        "graph1": _init_block(nk(), (67, 64), (64, 64), 64, after_dims=(64, 64)),
        "downsample2": _init_block(nk(), (67, 128), (128, 128), 64),
        "graph2": _init_block(nk(), (131, 128), (128, 128), 128, after_dims=(128, 128)),
        "downsample3": _init_block(nk(), (131, 300), (300, 300), 128),
        "graph3": _init_block(nk(), (303, 300), (300, 300), 384, after_dims=(300, 300)),
        "upsample1": _init_block(nk(), (303, 128), (128, 128), 384,
                                 before_dims=(128, 128), after_dims=(128, 128)),
        "graph2_update": _init_block(nk(), (131, 128), (128, 128), 128, after_dims=(128, 128)),
        # TODO(synk): reference declares upsample2 in_inter_channels=(64+3, 64) but its input
        # features are 128-dim (graph2_update output); use (128+3, 64) so the dataflow runs.
        "upsample2": _init_block(nk(), (131, 64), (64, 64), 128,
                                 before_dims=(64, 64), after_dims=(64, 64)),
        "graph1_update": _init_block(nk(), (67, 64), (64, 64), 64, after_dims=(64, 64)),
        # upsample3 is declared in the reference __init__ but never used in forward; omitted.
    }


# ----------------------------------------------------------------------------
# Host-side dense slot table (slot-major layout) for the vectorized segment-max.
# Inside output tile t, the edge row of (output slot r, neighbor slot s) is at
#   global_row = t*tile_l*max_deg + s*tile_l + r
# ----------------------------------------------------------------------------
def _choose_tile_l(l, per_row_bytes, fixed_bytes, budget):
    l = max(int(l), 1)
    avail = max(int(budget) - int(fixed_bytes), per_row_bytes * 8)
    tile = max(8, int(avail // per_row_bytes) // 8 * 8)
    tile = min(tile, 1024, _round_up(l, 8))
    n_tiles = -(-l // tile)
    if n_tiles == 1 and l >= 128:
        # v7x megacore: keep both TensorCores busy on mid-size levels.
        n_tiles = 2
    tile = _round_up(-(-l // n_tiles), 8)
    return tile, n_tiles * tile


def _build_slots(edge, l, row_bytes_fn, fixed_bytes, budget):
    edge = np.asarray(edge, np.int64).reshape(2, -1)
    cur, last = edge[0], edge[1]
    deg = np.zeros(max(l, 1), np.int64)
    if cur.size:
        np.add.at(deg, cur, 1)
    max_deg = int(max(1, deg.max())) if deg.size else 1
    tile_l, l_pad = _choose_tile_l(l, row_bytes_fn(max_deg), fixed_bytes, budget)

    nbr = np.zeros((l_pad, max_deg), np.int64)
    if cur.size:
        order = np.argsort(cur, kind="stable")
        cur_s, last_s = cur[order], last[order]
        starts = np.zeros_like(deg)
        starts[1:] = np.cumsum(deg)[:-1]
        slot = np.arange(cur_s.size, dtype=np.int64) - starts[cur_s]
        nbr[cur_s, slot] = last_s
    ctr = np.broadcast_to(np.minimum(np.arange(l_pad), max(l - 1, 0))[:, None],
                          (l_pad, max_deg)).copy()
    deg_col = np.zeros((l_pad, 1), np.int32)
    deg_col[:l, 0] = deg[:l]

    n_tiles = l_pad // tile_l

    def slot_major(a):
        return np.ascontiguousarray(
            a.reshape(n_tiles, tile_l, max_deg).transpose(0, 2, 1)).reshape(-1)

    return (slot_major(nbr).astype(np.int32), slot_major(ctr).astype(np.int32),
            deg_col, max_deg, tile_l, l_pad)


# ----------------------------------------------------------------------------
# Fused block kernel:
#   streamed in_mlp -> degree-masked segment-max -> out_mlp [-> +before(res) -> after]
# ----------------------------------------------------------------------------
def _fused_block(p, last_coors8, last_features, current_coors8, edge,
                 res=None, cache=None, cache_key=None):
    l = int(current_coors8.shape[0])
    feat_pad = int(p["wf"].shape[0])
    assert int(last_features.shape[1]) == feat_pad

    layers = list(p["in_rest"]) + list(p["out"]) + list(p["before"]) + list(p["after"])
    final_pad = int(p["final_pad"])
    has_res = res is not None
    if has_res:
        res_w = int(p["before"][0]["w"].shape[0]) if p["before"] else final_pad
        assert int(res.shape[1]) == res_w
    else:
        res_w = 0

    # ---- VMEM-budgeted tile size --------------------------------------------
    cap = _vmem_cap()
    budget = int(cap * 0.55)
    vmem_limit = int(min(int(cap * 0.72), cap - (8 << 20)))
    max_w = max([final_pad, feat_pad, int(p["wr"].shape[1])] +
                [int(lyr["w"].shape[1]) for lyr in layers])
    lane = lambda c: _round_up(max(int(c), 1), 128)

    def row_bytes(max_deg):
        b = 2 * max_deg * lane(feat_pad) * 2      # x_feat bf16 (double-buffered)
        b += 2 * max_deg * lane(8) * 2            # rel bf16
        b += 2 * lane(1) * 4                      # deg int32
        if has_res:
            b += 2 * lane(res_w) * 4              # residual f32
        b += 2 * lane(final_pad) * 4              # output f32
        b += 4 * lane(max_w) * 4                  # live f32 intermediates
        return b

    fixed = 2 * (p["wf"].size + p["wr"].size) * 2 + 2 * p["b1"].size * 4
    for lyr in layers:
        fixed += 2 * lyr["w"].size * 2 + 2 * lyr["b"].size * 4
    fixed += 2 << 20  # compiler scratch / misc margin

    # ---- host-side slot table (cached for graphs reused twice) --------------
    key = None
    if cache is not None and cache_key is not None:
        key = (cache_key, feat_pad, res_w, final_pad, max_w)
    if key is not None and key in cache:
        tbl = cache[key]
    else:
        tbl = _build_slots(edge, l, row_bytes, fixed, budget)
        if key is not None:
            cache[key] = tbl
    nbr, ctr, deg_col, max_deg, tile_l, l_pad = tbl
    rows = tile_l * max_deg
    n_tiles = l_pad // tile_l

    # ---- device-side operand build (gather runs in XLA; see TODO above) -----
    feats_bf16 = last_features.astype(jnp.bfloat16)
    nbr_j = jnp.asarray(nbr)
    ctr_j = jnp.asarray(ctr)
    x_feat = jnp.take(feats_bf16, nbr_j, axis=0)                       # (l_pad*max_deg, feat_pad)
    rel = (jnp.take(last_coors8, nbr_j, axis=0)
           - jnp.take(current_coors8, ctr_j, axis=0)).astype(jnp.bfloat16)  # (rows_total, 8)
    deg_j = jnp.asarray(deg_col)                                        # (l_pad, 1) int32
    if has_res:
        res_p = jnp.pad(res, ((0, l_pad - l), (0, 0)))

    n_in_rest = len(p["in_rest"])
    n_out = len(p["out"])
    n_bef = len(p["before"])
    n_aft = len(p["after"])

    def kernel(*refs):
        it = iter(refs)
        xf_ref = next(it)
        rel_ref = next(it)
        deg_ref = next(it)
        r_ref = next(it) if has_res else None
        wf_ref = next(it)
        wr_ref = next(it)
        b1_ref = next(it)

        def take(n):
            return [(next(it), next(it)) for _ in range(n)]

        w_in, w_out, w_bef, w_aft = take(n_in_rest), take(n_out), take(n_bef), take(n_aft)
        o_ref = next(it)

        def mlp(h, pairs):
            # bf16 MXU matmul, f32 accumulate; bias + ReLU in f32 (v5e-safe).
            for (w_r, b_r) in pairs:
                acc = jnp.dot(h.astype(jnp.bfloat16), w_r[...],
                              preferred_element_type=jnp.float32)
                h = jnp.maximum(acc + b_r[...], 0.0)
            return h

        deg = deg_ref[...]                     # (tile_l, 1) int32
        wf = wf_ref[...]
        wr = wr_ref[...]
        b1 = b1_ref[...]

        # Streamed in_mlp + degree-masked running max over neighbor slots.
        agg = None
        for s in range(max_deg):
            lo = s * tile_l
            xf = xf_ref[lo:lo + tile_l, :]
            xr = rel_ref[lo:lo + tile_l, :]
            h = (jnp.dot(xf, wf, preferred_element_type=jnp.float32)
                 + jnp.dot(xr, wr, preferred_element_type=jnp.float32) + b1)
            h = jnp.maximum(h, 0.0)
            h = mlp(h, w_in)
            # Valid-slot mask (h >= 0 after ReLU, scatter-max is zero-initialized).
            h = h * (deg > s).astype(jnp.float32)
            agg = h if agg is None else jnp.maximum(agg, h)

        y = mlp(agg, w_out)
        if has_res:
            r = r_ref[...]
            if n_bef:
                r = mlp(r, w_bef)
            y = y + r
            if n_aft:
                y = mlp(y, w_aft)
        o_ref[...] = y

    in_specs = [pl.BlockSpec((rows, feat_pad), lambda t: (t, 0)),
                pl.BlockSpec((rows, 8), lambda t: (t, 0)),
                pl.BlockSpec((tile_l, 1), lambda t: (t, 0))]
    operands = [x_feat, rel, deg_j]
    if has_res:
        in_specs.append(pl.BlockSpec((tile_l, res_w), lambda t: (t, 0)))
        operands.append(res_p)

    def add_const(arr):
        operands.append(arr)
        in_specs.append(pl.BlockSpec(arr.shape, lambda t: (0, 0)))

    add_const(p["wf"])
    add_const(p["wr"])
    add_const(p["b1"])
    for lyr in layers:
        add_const(lyr["w"])
        add_const(lyr["b"])

    out = pl.pallas_call(
        kernel,
        out_shape=jax.ShapeDtypeStruct((l_pad, final_pad), jnp.float32),
        grid=(n_tiles,),
        in_specs=in_specs,
        out_specs=pl.BlockSpec((tile_l, final_pad), lambda t: (t, 0)),
        compiler_params=pltpu.CompilerParams(
            dimension_semantics=("parallel",),
            vmem_limit_bytes=vmem_limit),
    )(*operands)
    # Keep channel padding (lane-dense) between blocks; only trim padded rows.
    return out[:l]


# ----------------------------------------------------------------------------
# Blocks (BasicBlock / DownsampleBlock / GraphBlock / UpsampleBlock semantics)
# ----------------------------------------------------------------------------
def downsample_block(p, last_coors8, last_feats, cur_coors8, edge):
    return _fused_block(p, last_coors8, last_feats, cur_coors8, edge, res=None)


def graph_block(p, coors8, feats, edge, cache=None, cache_key=None):
    return _fused_block(p, coors8, feats, coors8, edge, res=feats,
                        cache=cache, cache_key=cache_key)


def upsample_block(p, cur_coors8, cur_feats, last_coors8, last_feats, edge):
    return _fused_block(p, cur_coors8, cur_feats, last_coors8, edge, res=last_feats)


# ----------------------------------------------------------------------------
# Host-side graph construction (external helpers of the original repo)
# ----------------------------------------------------------------------------
def _voxelize_np(coords, voxel_size):
    vox = np.floor(coords / np.asarray(voxel_size, np.float64)).astype(np.int64)
    _, first = np.unique(vox, axis=0, return_index=True)
    first = np.sort(first).astype(np.int32)
    return coords[first], first


def _radius_edges_np(current, last, radius, max_neighbors=None):
    # returns 2 x E int32 : row 0 = current index, row 1 = last index
    d2 = ((current[:, None, :] - last[None, :, :]) ** 2).sum(-1)
    r2 = radius * radius
    cur_list, last_list = [], []
    for ci in range(current.shape[0]):
        nbr = np.nonzero(d2[ci] <= r2)[0]
        if max_neighbors is not None and nbr.size > max_neighbors:
            order = np.argsort(d2[ci][nbr], kind="stable")[:max_neighbors]
            nbr = nbr[order]
        cur_list.extend([ci] * nbr.size)
        last_list.extend(nbr.tolist())
    return np.asarray([cur_list, last_list], dtype=np.int32).reshape(2, -1)


def _inter_level_graph_np(coords_low, coords_high, radius, max_num_neighbors):
    e_up = _radius_edges_np(coords_high, coords_low, radius, max_num_neighbors)
    e_down = _radius_edges_np(coords_low, coords_high, radius, max_num_neighbors)
    return e_up, e_down


def _intra_level_graph_np(coords, radius):
    return _radius_edges_np(coords, coords, radius)


# ----------------------------------------------------------------------------
# Full HGNN forward
# ----------------------------------------------------------------------------
def hgnn_forward(params, points, downsample_voxel_sizes, inter_radius, intra_radius,
                 max_num_neighbors):
    """points: list with a single (N, 4) array (xyz + 1 extra channel), as in the reference."""
    assert len(points) == 1
    pts_np = np.asarray(points[0], np.float32)
    coords0 = pts_np[:, :3]

    level_coords_np = [coords0]
    level_indices = []
    for vs in downsample_voxel_sizes:
        c, idx = _voxelize_np(coords0, vs)
        level_coords_np.append(c)
        level_indices.append(idx)

    inter_graphs, intra_graphs = {}, {}
    for i in range(len(level_coords_np)):
        if i != len(level_coords_np) - 1:
            (inter_graphs[f"{i}_{i + 1}"],
             inter_graphs[f"{i + 1}_{i}"]) = _inter_level_graph_np(
                level_coords_np[i], level_coords_np[i + 1], inter_radius[i], max_num_neighbors)
        if i != 0:
            intra_graphs[f"{i}_{i}"] = _intra_level_graph_np(level_coords_np[i],
                                                             intra_radius[i - 1])

    # Coordinates padded once to 8 lanes (reused for every block's rel build).
    coords8 = [jnp.pad(jnp.asarray(c, jnp.float32), ((0, 0), (0, 5))) for c in level_coords_np]
    # Raw points (xyz + reflectance) padded to the downsample1 feature width.
    feat0_pad = int(params["downsample1"]["wf"].shape[0])
    feats0 = jnp.pad(jnp.asarray(pts_np, jnp.float32),
                     ((0, 0), (0, feat0_pad - pts_np.shape[1])))

    p = params
    cache = {}

    p1 = downsample_block(p["downsample1"], coords8[0], feats0, coords8[1], inter_graphs["0_1"])
    encode_p1 = graph_block(p["graph1"], coords8[1], p1, intra_graphs["1_1"], cache, "1_1")
    p2 = downsample_block(p["downsample2"], coords8[1], encode_p1, coords8[2], inter_graphs["1_2"])
    encode_p2 = graph_block(p["graph2"], coords8[2], p2, intra_graphs["2_2"], cache, "2_2")
    p3 = downsample_block(p["downsample3"], coords8[2], encode_p2, coords8[3], inter_graphs["2_3"])
    p3 = graph_block(p["graph3"], coords8[3], p3, intra_graphs["3_3"], cache, "3_3")
    decode_p2 = upsample_block(p["upsample1"], coords8[3], p3, coords8[2], encode_p2,
                               inter_graphs["3_2"])
    p2 = graph_block(p["graph2_update"], coords8[2], decode_p2, intra_graphs["2_2"], cache, "2_2")
    decode_p1 = upsample_block(p["upsample2"], coords8[2], p2, coords8[1], encode_p1,
                               inter_graphs["2_1"])
    p1 = graph_block(p["graph1_update"], coords8[1], decode_p1, intra_graphs["1_1"], cache, "1_1")

    idx1, idx2, idx3 = level_indices
    coords = [jnp.asarray(c, jnp.float32) for c in level_coords_np]
    d3 = p["graph3"]["out_dim"]
    d2 = p["graph2_update"]["out_dim"]
    d1 = p["graph1_update"]["out_dim"]
    fp_xyz = [coords[3][None], coords[2][None], coords[1][None]]
    fp_features = [jnp.transpose(p3[None, :, :d3], (0, 2, 1)),
                   jnp.transpose(p2[None, :, :d2], (0, 2, 1)),
                   jnp.transpose(p1[None, :, :d1], (0, 2, 1))]
    fp_indices = [jnp.asarray(idx3)[None], jnp.asarray(idx2)[None], jnp.asarray(idx1)[None]]
    return {"fp_xyz": fp_xyz, "fp_features": fp_features, "fp_indices": fp_indices}


if __name__ == "__main__":
    key = jax.random.PRNGKey(0)
    k_pts, k_extra, k_params = jax.random.split(key, 3)

    n_points = 64
    xyz = jax.random.uniform(k_pts, (n_points, 3), jnp.float32, 0.0, 4.0)
    extra = jax.random.uniform(k_extra, (n_points, 1), jnp.float32)
    points = jnp.concatenate([xyz, extra], axis=1)  # (N, 4): xyz + reflectance

    params = hgnn_init(k_params)

    downsample_voxel_sizes = [[1.0, 1.0, 1.0], [1.6, 1.6, 1.6], [2.5, 2.5, 2.5]]
    inter_radius = [1.5, 2.2, 3.2]
    intra_radius = [1.8, 2.6, 4.0]
    max_num_neighbors = 8

    out = hgnn_forward(params, [points], downsample_voxel_sizes, inter_radius,
                       intra_radius, max_num_neighbors)
    for arr in out["fp_features"] + out["fp_xyz"] + out["fp_indices"]:
        jax.block_until_ready(arr)

    print("KERNEL_OK")
</pallas_src>

<mosaic_0001>
module attributes {stable_mosaic.version = 11 : i64} {
  func.func @kernel(%arg0: i32, %arg1: memref<320x8xbf16, #tpu.memory_space<vmem>>, %arg2: memref<320x8xbf16, #tpu.memory_space<vmem>>, %arg3: memref<40x1xi32, #tpu.memory_space<vmem>>, %arg4: memref<8x64xbf16, #tpu.memory_space<vmem>>, %arg5: memref<8x64xbf16, #tpu.memory_space<vmem>>, %arg6: memref<1x64xf32, #tpu.memory_space<vmem>>, %arg7: memref<64x64xbf16, #tpu.memory_space<vmem>>, %arg8: memref<1x64xf32, #tpu.memory_space<vmem>>, %arg9: memref<64x64xbf16, #tpu.memory_space<vmem>>, %arg10: memref<1x64xf32, #tpu.memory_space<vmem>>, %arg11: memref<40x64xf32, #tpu.memory_space<vmem>>) attributes {dimension_semantics = [#tpu.dimension_semantics<parallel>], iteration_bounds = array<i64: 1>, scalar_prefetch = 0 : i64, scratch_operands = 0 : i64, tpu.core_type = #tpu.core_type<tc>, window_params = [{transform_indices = @transform_0, window_bounds = array<i64: 320, 8>}, {transform_indices = @transform_1, window_bounds = array<i64: 320, 8>}, {transform_indices = @transform_2, window_bounds = array<i64: 40, 1>}, {pipeline_mode = #tpu.pipeline_mode<synchronous>, transform_indices = @transform_3, window_bounds = array<i64: 8, 64>}, {pipeline_mode = #tpu.pipeline_mode<synchronous>, transform_indices = @transform_4, window_bounds = array<i64: 8, 64>}, {pipeline_mode = #tpu.pipeline_mode<synchronous>, transform_indices = @transform_5, window_bounds = array<i64: 1, 64>}, {pipeline_mode = #tpu.pipeline_mode<synchronous>, transform_indices = @transform_6, window_bounds = array<i64: 64, 64>}, {pipeline_mode = #tpu.pipeline_mode<synchronous>, transform_indices = @transform_7, window_bounds = array<i64: 1, 64>}, {pipeline_mode = #tpu.pipeline_mode<synchronous>, transform_indices = @transform_8, window_bounds = array<i64: 64, 64>}, {pipeline_mode = #tpu.pipeline_mode<synchronous>, transform_indices = @transform_9, window_bounds = array<i64: 1, 64>}, {transform_indices = @transform_10, window_bounds = array<i64: 40, 64>}]} {
    %c0 = arith.constant 0 : index
    %c0_0 = arith.constant 0 : index
    %0 = vector.load %arg3[%c0, %c0_0] : memref<40x1xi32, #tpu.memory_space<vmem>>, vector<40x1xi32>
    %c0_1 = arith.constant 0 : index
    %c0_2 = arith.constant 0 : index
    %1 = vector.load %arg4[%c0_1, %c0_2] : memref<8x64xbf16, #tpu.memory_space<vmem>>, vector<8x64xbf16>
    %c0_3 = arith.constant 0 : index
    %c0_4 = arith.constant 0 : index
    %2 = vector.load %arg5[%c0_3, %c0_4] : memref<8x64xbf16, #tpu.memory_space<vmem>>, vector<8x64xbf16>
    %c0_5 = arith.constant 0 : index
    %c0_6 = arith.constant 0 : index
    %3 = vector.load %arg6[%c0_5, %c0_6] : memref<1x64xf32, #tpu.memory_space<vmem>>, vector<1x64xf32>
    %c0_7 = arith.constant 0 : index
    %c0_8 = arith.constant 0 : index
    %4 = vector.load %arg1[%c0_7, %c0_8] : memref<320x8xbf16, #tpu.memory_space<vmem>>, vector<40x8xbf16>
    %c0_9 = arith.constant 0 : index
    %c0_10 = arith.constant 0 : index
    %5 = vector.load %arg2[%c0_9, %c0_10] : memref<320x8xbf16, #tpu.memory_space<vmem>>, vector<40x8xbf16>
    %cst = arith.constant dense<0.000000e+00> : vector<40x64xf32>
    %6 = tpu.matmul %4, %1, %cst {dimension_numbers = #tpu.dot_dimension_numbers<[1], [0], [0], [1], [0, 0, 1, 1], [], []>} : vector<40x8xbf16>, vector<8x64xbf16>, vector<40x64xf32> -> vector<40x64xf32>
    %cst_11 = arith.constant dense<0.000000e+00> : vector<40x64xf32>
    %7 = tpu.matmul %5, %2, %cst_11 {dimension_numbers = #tpu.dot_dimension_numbers<[1], [0], [0], [1], [0, 0, 1, 1], [], []>} : vector<40x8xbf16>, vector<8x64xbf16>, vector<40x64xf32> -> vector<40x64xf32>
    %8 = arith.addf %6, %7 : vector<40x64xf32>
    %9 = vector.broadcast %3 : vector<1x64xf32> to vector<40x64xf32>
    %10 = arith.addf %8, %9 : vector<40x64xf32>
    %cst_12 = arith.constant 0.000000e+00 : f32
    %11 = vector.broadcast %cst_12 : f32 to vector<40x64xf32>
    %12 = arith.maximumf %10, %11 : vector<40x64xf32>
    %13 = arith.truncf %12 : vector<40x64xf32> to vector<40x64xbf16>
    %c0_13 = arith.constant 0 : index
    %c0_14 = arith.constant 0 : index
    %14 = vector.load %arg7[%c0_13, %c0_14] : memref<64x64xbf16, #tpu.memory_space<vmem>>, vector<64x64xbf16>
    %cst_15 = arith.constant dense<0.000000e+00> : vector<40x64xf32>
    %15 = tpu.matmul %13, %14, %cst_15 {dimension_numbers = #tpu.dot_dimension_numbers<[1], [0], [0], [1], [0, 0, 1, 1], [], []>} : vector<40x64xbf16>, vector<64x64xbf16>, vector<40x64xf32> -> vector<40x64xf32>
    %c0_16 = arith.constant 0 : index
    %c0_17 = arith.constant 0 : index
    %16 = vector.load %arg8[%c0_16, %c0_17] : memref<1x64xf32, #tpu.memory_space<vmem>>, vector<1x64xf32>
    %17 = vector.broadcast %16 : vector<1x64xf32> to vector<40x64xf32>
    %18 = arith.addf %15, %17 : vector<40x64xf32>
    %cst_18 = arith.constant 0.000000e+00 : f32
    %19 = vector.broadcast %cst_18 : f32 to vector<40x64xf32>
    %20 = arith.maximumf %18, %19 : vector<40x64xf32>
    %c0_i32 = arith.constant 0 : i32
    %21 = vector.broadcast %c0_i32 : i32 to vector<40x1xi32>
    %22 = arith.cmpi sgt, %0, %21 : vector<40x1xi32>
    %23 = arith.extui %22 : vector<40x1xi1> to vector<40x1xi32>
    %24 = arith.sitofp %23 : vector<40x1xi32> to vector<40x1xf32>
    %25 = vector.broadcast %24 : vector<40x1xf32> to vector<40x64xf32>
    %26 = arith.mulf %20, %25 : vector<40x64xf32>
    %c40 = arith.constant 40 : index
    %c0_19 = arith.constant 0 : index
    %27 = vector.load %arg1[%c40, %c0_19] : memref<320x8xbf16, #tpu.memory_space<vmem>>, vector<40x8xbf16>
    %c40_20 = arith.constant 40 : index
    %c0_21 = arith.constant 0 : index
    %28 = vector.load %arg2[%c40_20, %c0_21] : memref<320x8xbf16, #tpu.memory_space<vmem>>, vector<40x8xbf16>
    %cst_22 = arith.constant dense<0.000000e+00> : vector<40x64xf32>
    %29 = tpu.matmul %27, %1, %cst_22 {dimension_numbers = #tpu.dot_dimension_numbers<[1], [0], [0], [1], [0, 0, 1, 1], [], []>} : vector<40x8xbf16>, vector<8x64xbf16>, vector<40x64xf32> -> vector<40x64xf32>
    %cst_23 = arith.constant dense<0.000000e+00> : vector<40x64xf32>
    %30 = tpu.matmul %28, %2, %cst_23 {dimension_numbers = #tpu.dot_dimension_numbers<[1], [0], [0], [1], [0, 0, 1, 1], [], []>} : vector<40x8xbf16>, vector<8x64xbf16>, vector<40x64xf32> -> vector<40x64xf32>
    %31 = arith.addf %29, %30 : vector<40x64xf32>
    %32 = vector.broadcast %3 : vector<1x64xf32> to vector<40x64xf32>
    %33 = arith.addf %31, %32 : vector<40x64xf32>
    %cst_24 = arith.constant 0.000000e+00 : f32
    %34 = vector.broadcast %cst_24 : f32 to vector<40x64xf32>
    %35 = arith.maximumf %33, %34 : vector<40x64xf32>
    %36 = arith.truncf %35 : vector<40x64xf32> to vector<40x64xbf16>
    %c0_25 = arith.constant 0 : index
    %c0_26 = arith.constant 0 : index
    %37 = vector.load %arg7[%c0_25, %c0_26] : memref<64x64xbf16, #tpu.memory_space<vmem>>, vector<64x64xbf16>
    %cst_27 = arith.constant dense<0.000000e+00> : vector<40x64xf32>
    %38 = tpu.matmul %36, %37, %cst_27 {dimension_numbers = #tpu.dot_dimension_numbers<[1], [0], [0], [1], [0, 0, 1, 1], [], []>} : vector<40x64xbf16>, vector<64x64xbf16>, vector<40x64xf32> -> vector<40x64xf32>
    %c0_28 = arith.constant 0 : index
    %c0_29 = arith.constant 0 : index
    %39 = vector.load %arg8[%c0_28, %c0_29] : memref<1x64xf32, #tpu.memory_space<vmem>>, vector<1x64xf32>
    %40 = vector.broadcast %39 : vector<1x64xf32> to vector<40x64xf32>
    %41 = arith.addf %38, %40 : vector<40x64xf32>
    %cst_30 = arith.constant 0.000000e+00 : f32
    %42 = vector.broadcast %cst_30 : f32 to vector<40x64xf32>
    %43 = arith.maximumf %41, %42 : vector<40x64xf32>
    %c1_i32 = arith.constant 1 : i32
    %44 = vector.broadcast %c1_i32 : i32 to vector<40x1xi32>
    %45 = arith.cmpi sgt, %0, %44 : vector<40x1xi32>
    %46 = arith.extui %45 : vector<40x1xi1> to vector<40x1xi32>
    %47 = arith.sitofp %46 : vector<40x1xi32> to vector<40x1xf32>
    %48 = vector.broadcast %47 : vector<40x1xf32> to vector<40x64xf32>
    %49 = arith.mulf %43, %48 : vector<40x64xf32>
    %50 = arith.maximumf %26, %49 : vector<40x64xf32>
    %c80 = arith.constant 80 : index
    %c0_31 = arith.constant 0 : index
    %51 = vector.load %arg1[%c80, %c0_31] : memref<320x8xbf16, #tpu.memory_space<vmem>>, vector<40x8xbf16>
    %c80_32 = arith.constant 80 : index
    %c0_33 = arith.constant 0 : index
    %52 = vector.load %arg2[%c80_32, %c0_33] : memref<320x8xbf16, #tpu.memory_space<vmem>>, vector<40x8xbf16>
    %cst_34 = arith.constant dense<0.000000e+00> : vector<40x64xf32>
    %53 = tpu.matmul %51, %1, %cst_34 {dimension_numbers = #tpu.dot_dimension_numbers<[1], [0], [0], [1], [0, 0, 1, 1], [], []>} : vector<40x8xbf16>, vector<8x64xbf16>, vector<40x64xf32> -> vector<40x64xf32>
    %cst_35 = arith.constant dense<0.000000e+00> : vector<40x64xf32>
    %54 = tpu.matmul %52, %2, %cst_35 {dimension_numbers = #tpu.dot_dimension_numbers<[1], [0], [0], [1], [0, 0, 1, 1], [], []>} : vector<40x8xbf16>, vector<8x64xbf16>, vector<40x64xf32> -> vector<40x64xf32>
    %55 = arith.addf %53, %54 : vector<40x64xf32>
    %56 = vector.broadcast %3 : vector<1x64xf32> to vector<40x64xf32>
    %57 = arith.addf %55, %56 : vector<40x64xf32>
    %cst_36 = arith.constant 0.000000e+00 : f32
    %58 = vector.broadcast %cst_36 : f32 to vector<40x64xf32>
    %59 = arith.maximumf %57, %58 : vector<40x64xf32>
    %60 = arith.truncf %59 : vector<40x64xf32> to vector<40x64xbf16>
    %c0_37 = arith.constant 0 : index
    %c0_38 = arith.constant 0 : index
    %61 = vector.load %arg7[%c0_37, %c0_38] : memref<64x64xbf16, #tpu.memory_space<vmem>>, vector<64x64xbf16>
    %cst_39 = arith.constant dense<0.000000e+00> : vector<40x64xf32>
    %62 = tpu.matmul %60, %61, %cst_39 {dimension_numbers = #tpu.dot_dimension_numbers<[1], [0], [0], [1], [0, 0, 1, 1], [], []>} : vector<40x64xbf16>, vector<64x64xbf16>, vector<40x64xf32> -> vector<40x64xf32>
    %c0_40 = arith.constant 0 : index
    %c0_41 = arith.constant 0 : index
    %63 = vector.load %arg8[%c0_40, %c0_41] : memref<1x64xf32, #tpu.memory_space<vmem>>, vector<1x64xf32>
    %64 = vector.broadcast %63 : vector<1x64xf32> to vector<40x64xf32>
    %65 = arith.addf %62, %64 : vector<40x64xf32>
    %cst_42 = arith.constant 0.000000e+00 : f32
    %66 = vector.broadcast %cst_42 : f32 to vector<40x64xf32>
    %67 = arith.maximumf %65, %66 : vector<40x64xf32>
    %c2_i32 = arith.constant 2 : i32
    %68 = vector.broadcast %c2_i32 : i32 to vector<40x1xi32>
    %69 = arith.cmpi sgt, %0, %68 : vector<40x1xi32>
    %70 = arith.extui %69 : vector<40x1xi1> to vector<40x1xi32>
    %71 = arith.sitofp %70 : vector<40x1xi32> to vector<40x1xf32>
    %72 = vector.broadcast %71 : vector<40x1xf32> to vector<40x64xf32>
    %73 = arith.mulf %67, %72 : vector<40x64xf32>
    %74 = arith.maximumf %50, %73 : vector<40x64xf32>
    %c120 = arith.constant 120 : index
    %c0_43 = arith.constant 0 : index
    %75 = vector.load %arg1[%c120, %c0_43] : memref<320x8xbf16, #tpu.memory_space<vmem>>, vector<40x8xbf16>
    %c120_44 = arith.constant 120 : index
    %c0_45 = arith.constant 0 : index
    %76 = vector.load %arg2[%c120_44, %c0_45] : memref<320x8xbf16, #tpu.memory_space<vmem>>, vector<40x8xbf16>
    %cst_46 = arith.constant dense<0.000000e+00> : vector<40x64xf32>
    %77 = tpu.matmul %75, %1, %cst_46 {dimension_numbers = #tpu.dot_dimension_numbers<[1], [0], [0], [1], [0, 0, 1, 1], [], []>} : vector<40x8xbf16>, vector<8x64xbf16>, vector<40x64xf32> -> vector<40x64xf32>
    %cst_47 = arith.constant dense<0.000000e+00> : vector<40x64xf32>
    %78 = tpu.matmul %76, %2, %cst_47 {dimension_numbers = #tpu.dot_dimension_numbers<[1], [0], [0], [1], [0, 0, 1, 1], [], []>} : vector<40x8xbf16>, vector<8x64xbf16>, vector<40x64xf32> -> vector<40x64xf32>
    %79 = arith.addf %77, %78 : vector<40x64xf32>
    %80 = vector.broadcast %3 : vector<1x64xf32> to vector<40x64xf32>
    %81 = arith.addf %79, %80 : vector<40x64xf32>
    %cst_48 = arith.constant 0.000000e+00 : f32
    %82 = vector.broadcast %cst_48 : f32 to vector<40x64xf32>
    %83 = arith.maximumf %81, %82 : vector<40x64xf32>
    %84 = arith.truncf %83 : vector<40x64xf32> to vector<40x64xbf16>
    %c0_49 = arith.constant 0 : index
    %c0_50 = arith.constant 0 : index
    %85 = vector.load %arg7[%c0_49, %c0_50] : memref<64x64xbf16, #tpu.memory_space<vmem>>, vector<64x64xbf16>
    %cst_51 = arith.constant dense<0.000000e+00> : vector<40x64xf32>
    %86 = tpu.matmul %84, %85, %cst_51 {dimension_numbers = #tpu.dot_dimension_numbers<[1], [0], [0], [1], [0, 0, 1, 1], [], []>} : vector<40x64xbf16>, vector<64x64xbf16>, vector<40x64xf32> -> vector<40x64xf32>
    %c0_52 = arith.constant 0 : index
    %c0_53 = arith.constant 0 : index
    %87 = vector.load %arg8[%c0_52, %c0_53] : memref<1x64xf32, #tpu.memory_space<vmem>>, vector<1x64xf32>
    %88 = vector.broadcast %87 : vector<1x64xf32> to vector<40x64xf32>
    %89 = arith.addf %86, %88 : vector<40x64xf32>
    %cst_54 = arith.constant 0.000000e+00 : f32
    %90 = vector.broadcast %cst_54 : f32 to vector<40x64xf32>
    %91 = arith.maximumf %89, %90 : vector<40x64xf32>
    %c3_i32 = arith.constant 3 : i32
    %92 = vector.broadcast %c3_i32 : i32 to vector<40x1xi32>
    %93 = arith.cmpi sgt, %0, %92 : vector<40x1xi32>
    %94 = arith.extui %93 : vector<40x1xi1> to vector<40x1xi32>
    %95 = arith.sitofp %94 : vector<40x1xi32> to vector<40x1xf32>
    %96 = vector.broadcast %95 : vector<40x1xf32> to vector<40x64xf32>
    %97 = arith.mulf %91, %96 : vector<40x64xf32>
    %98 = arith.maximumf %74, %97 : vector<40x64xf32>
    %c160 = arith.constant 160 : index
    %c0_55 = arith.constant 0 : index
    %99 = vector.load %arg1[%c160, %c0_55] : memref<320x8xbf16, #tpu.memory_space<vmem>>, vector<40x8xbf16>
    %c160_56 = arith.constant 160 : index
    %c0_57 = arith.constant 0 : index
    %100 = vector.load %arg2[%c160_56, %c0_57] : memref<320x8xbf16, #tpu.memory_space<vmem>>, vector<40x8xbf16>
    %cst_58 = arith.constant dense<0.000000e+00> : vector<40x64xf32>
    %101 = tpu.matmul %99, %1, %cst_58 {dimension_numbers = #tpu.dot_dimension_numbers<[1], [0], [0], [1], [0, 0, 1, 1], [], []>} : vector<40x8xbf16>, vector<8x64xbf16>, vector<40x64xf32> -> vector<40x64xf32>
    %cst_59 = arith.constant dense<0.000000e+00> : vector<40x64xf32>
    %102 = tpu.matmul %100, %2, %cst_59 {dimension_numbers = #tpu.dot_dimension_numbers<[1], [0], [0], [1], [0, 0, 1, 1], [], []>} : vector<40x8xbf16>, vector<8x64xbf16>, vector<40x64xf32> -> vector<40x64xf32>
    %103 = arith.addf %101, %102 : vector<40x64xf32>
    %104 = vector.broadcast %3 : vector<1x64xf32> to vector<40x64xf32>
    %105 = arith.addf %103, %104 : vector<40x64xf32>
    %cst_60 = arith.constant 0.000000e+00 : f32
    %106 = vector.broadcast %cst_60 : f32 to vector<40x64xf32>
    %107 = arith.maximumf %105, %106 : vector<40x64xf32>
    %108 = arith.truncf %107 : vector<40x64xf32> to vector<40x64xbf16>
    %c0_61 = arith.constant 0 : index
    %c0_62 = arith.constant 0 : index
    %109 = vector.load %arg7[%c0_61, %c0_62] : memref<64x64xbf16, #tpu.memory_space<vmem>>, vector<64x64xbf16>
    %cst_63 = arith.constant dense<0.000000e+00> : vector<40x64xf32>
    %110 = tpu.matmul %108, %109, %cst_63 {dimension_numbers = #tpu.dot_dimension_numbers<[1], [0], [0], [1], [0, 0, 1, 1], [], []>} : vector<40x64xbf16>, vector<64x64xbf16>, vector<40x64xf32> -> vector<40x64xf32>
    %c0_64 = arith.constant 0 : index
    %c0_65 = arith.constant 0 : index
    %111 = vector.load %arg8[%c0_64, %c0_65] : memref<1x64xf32, #tpu.memory_space<vmem>>, vector<1x64xf32>
    %112 = vector.broadcast %111 : vector<1x64xf32> to vector<40x64xf32>
    %113 = arith.addf %110, %112 : vector<40x64xf32>
    %cst_66 = arith.constant 0.000000e+00 : f32
    %114 = vector.broadcast %cst_66 : f32 to vector<40x64xf32>
    %115 = arith.maximumf %113, %114 : vector<40x64xf32>
    %c4_i32 = arith.constant 4 : i32
    %116 = vector.broadcast %c4_i32 : i32 to vector<40x1xi32>
    %117 = arith.cmpi sgt, %0, %116 : vector<40x1xi32>
    %118 = arith.extui %117 : vector<40x1xi1> to vector<40x1xi32>
    %119 = arith.sitofp %118 : vector<40x1xi32> to vector<40x1xf32>
    %120 = vector.broadcast %119 : vector<40x1xf32> to vector<40x64xf32>
    %121 = arith.mulf %115, %120 : vector<40x64xf32>
    %122 = arith.maximumf %98, %121 : vector<40x64xf32>
    %c200 = arith.constant 200 : index
    %c0_67 = arith.constant 0 : index
    %123 = vector.load %arg1[%c200, %c0_67] : memref<320x8xbf16, #tpu.memory_space<vmem>>, vector<40x8xbf16>
    %c200_68 = arith.constant 200 : index
    %c0_69 = arith.constant 0 : index
    %124 = vector.load %arg2[%c200_68, %c0_69] : memref<320x8xbf16, #tpu.memory_space<vmem>>, vector<40x8xbf16>
    %cst_70 = arith.constant dense<0.000000e+00> : vector<40x64xf32>
    %125 = tpu.matmul %123, %1, %cst_70 {dimension_numbers = #tpu.dot_dimension_numbers<[1], [0], [0], [1], [0, 0, 1, 1], [], []>} : vector<40x8xbf16>, vector<8x64xbf16>, vector<40x64xf32> -> vector<40x64xf32>
    %cst_71 = arith.constant dense<0.000000e+00> : vector<40x64xf32>
    %126 = tpu.matmul %124, %2, %cst_71 {dimension_numbers = #tpu.dot_dimension_numbers<[1], [0], [0], [1], [0, 0, 1, 1], [], []>} : vector<40x8xbf16>, vector<8x64xbf16>, vector<40x64xf32> -> vector<40x64xf32>
    %127 = arith.addf %125, %126 : vector<40x64xf32>
    %128 = vector.broadcast %3 : vector<1x64xf32> to vector<40x64xf32>
    %129 = arith.addf %127, %128 : vector<40x64xf32>
    %cst_72 = arith.constant 0.000000e+00 : f32
    %130 = vector.broadcast %cst_72 : f32 to vector<40x64xf32>
    %131 = arith.maximumf %129, %130 : vector<40x64xf32>
    %132 = arith.truncf %131 : vector<40x64xf32> to vector<40x64xbf16>
    %c0_73 = arith.constant 0 : index
    %c0_74 = arith.constant 0 : index
    %133 = vector.load %arg7[%c0_73, %c0_74] : memref<64x64xbf16, #tpu.memory_space<vmem>>, vector<64x64xbf16>
    %cst_75 = arith.constant dense<0.000000e+00> : vector<40x64xf32>
    %134 = tpu.matmul %132, %133, %cst_75 {dimension_numbers = #tpu.dot_dimension_numbers<[1], [0], [0], [1], [0, 0, 1, 1], [], []>} : vector<40x64xbf16>, vector<64x64xbf16>, vector<40x64xf32> -> vector<40x64xf32>
    %c0_76 = arith.constant 0 : index
    %c0_77 = arith.constant 0 : index
    %135 = vector.load %arg8[%c0_76, %c0_77] : memref<1x64xf32, #tpu.memory_space<vmem>>, vector<1x64xf32>
    %136 = vector.broadcast %135 : vector<1x64xf32> to vector<40x64xf32>
    %137 = arith.addf %134, %136 : vector<40x64xf32>
    %cst_78 = arith.constant 0.000000e+00 : f32
    %138 = vector.broadcast %cst_78 : f32 to vector<40x64xf32>
    %139 = arith.maximumf %137, %138 : vector<40x64xf32>
    %c5_i32 = arith.constant 5 : i32
    %140 = vector.broadcast %c5_i32 : i32 to vector<40x1xi32>
    %141 = arith.cmpi sgt, %0, %140 : vector<40x1xi32>
    %142 = arith.extui %141 : vector<40x1xi1> to vector<40x1xi32>
    %143 = arith.sitofp %142 : vector<40x1xi32> to vector<40x1xf32>
    %144 = vector.broadcast %143 : vector<40x1xf32> to vector<40x64xf32>
    %145 = arith.mulf %139, %144 : vector<40x64xf32>
    %146 = arith.maximumf %122, %145 : vector<40x64xf32>
    %c240 = arith.constant 240 : index
    %c0_79 = arith.constant 0 : index
    %147 = vector.load %arg1[%c240, %c0_79] : memref<320x8xbf16, #tpu.memory_space<vmem>>, vector<40x8xbf16>
    %c240_80 = arith.constant 240 : index
    %c0_81 = arith.constant 0 : index
    %148 = vector.load %arg2[%c240_80, %c0_81] : memref<320x8xbf16, #tpu.memory_space<vmem>>, vector<40x8xbf16>
    %cst_82 = arith.constant dense<0.000000e+00> : vector<40x64xf32>
    %149 = tpu.matmul %147, %1, %cst_82 {dimension_numbers = #tpu.dot_dimension_numbers<[1], [0], [0], [1], [0, 0, 1, 1], [], []>} : vector<40x8xbf16>, vector<8x64xbf16>, vector<40x64xf32> -> vector<40x64xf32>
    %cst_83 = arith.constant dense<0.000000e+00> : vector<40x64xf32>
    %150 = tpu.matmul %148, %2, %cst_83 {dimension_numbers = #tpu.dot_dimension_numbers<[1], [0], [0], [1], [0, 0, 1, 1], [], []>} : vector<40x8xbf16>, vector<8x64xbf16>, vector<40x64xf32> -> vector<40x64xf32>
    %151 = arith.addf %149, %150 : vector<40x64xf32>
    %152 = vector.broadcast %3 : vector<1x64xf32> to vector<40x64xf32>
    %153 = arith.addf %151, %152 : vector<40x64xf32>
    %cst_84 = arith.constant 0.000000e+00 : f32
    %154 = vector.broadcast %cst_84 : f32 to vector<40x64xf32>
    %155 = arith.maximumf %153, %154 : vector<40x64xf32>
    %156 = arith.truncf %155 : vector<40x64xf32> to vector<40x64xbf16>
    %c0_85 = arith.constant 0 : index
    %c0_86 = arith.constant 0 : index
    %157 = vector.load %arg7[%c0_85, %c0_86] : memref<64x64xbf16, #tpu.memory_space<vmem>>, vector<64x64xbf16>
    %cst_87 = arith.constant dense<0.000000e+00> : vector<40x64xf32>
    %158 = tpu.matmul %156, %157, %cst_87 {dimension_numbers = #tpu.dot_dimension_numbers<[1], [0], [0], [1], [0, 0, 1, 1], [], []>} : vector<40x64xbf16>, vector<64x64xbf16>, vector<40x64xf32> -> vector<40x64xf32>
    %c0_88 = arith.constant 0 : index
    %c0_89 = arith.constant 0 : index
    %159 = vector.load %arg8[%c0_88, %c0_89] : memref<1x64xf32, #tpu.memory_space<vmem>>, vector<1x64xf32>
    %160 = vector.broadcast %159 : vector<1x64xf32> to vector<40x64xf32>
    %161 = arith.addf %158, %160 : vector<40x64xf32>
    %cst_90 = arith.constant 0.000000e+00 : f32
    %162 = vector.broadcast %cst_90 : f32 to vector<40x64xf32>
    %163 = arith.maximumf %161, %162 : vector<40x64xf32>
    %c6_i32 = arith.constant 6 : i32
    %164 = vector.broadcast %c6_i32 : i32 to vector<40x1xi32>
    %165 = arith.cmpi sgt, %0, %164 : vector<40x1xi32>
    %166 = arith.extui %165 : vector<40x1xi1> to vector<40x1xi32>
    %167 = arith.sitofp %166 : vector<40x1xi32> to vector<40x1xf32>
    %168 = vector.broadcast %167 : vector<40x1xf32> to vector<40x64xf32>
    %169 = arith.mulf %163, %168 : vector<40x64xf32>
    %170 = arith.maximumf %146, %169 : vector<40x64xf32>
    %c280 = arith.constant 280 : index
    %c0_91 = arith.constant 0 : index
    %171 = vector.load %arg1[%c280, %c0_91] : memref<320x8xbf16, #tpu.memory_space<vmem>>, vector<40x8xbf16>
    %c280_92 = arith.constant 280 : index
    %c0_93 = arith.constant 0 : index
    %172 = vector.load %arg2[%c280_92, %c0_93] : memref<320x8xbf16, #tpu.memory_space<vmem>>, vector<40x8xbf16>
    %cst_94 = arith.constant dense<0.000000e+00> : vector<40x64xf32>
    %173 = tpu.matmul %171, %1, %cst_94 {dimension_numbers = #tpu.dot_dimension_numbers<[1], [0], [0], [1], [0, 0, 1, 1], [], []>} : vector<40x8xbf16>, vector<8x64xbf16>, vector<40x64xf32> -> vector<40x64xf32>
    %cst_95 = arith.constant dense<0.000000e+00> : vector<40x64xf32>
    %174 = tpu.matmul %172, %2, %cst_95 {dimension_numbers = #tpu.dot_dimension_numbers<[1], [0], [0], [1], [0, 0, 1, 1], [], []>} : vector<40x8xbf16>, vector<8x64xbf16>, vector<40x64xf32> -> vector<40x64xf32>
    %175 = arith.addf %173, %174 : vector<40x64xf32>
    %176 = vector.broadcast %3 : vector<1x64xf32> to vector<40x64xf32>
    %177 = arith.addf %175, %176 : vector<40x64xf32>
    %cst_96 = arith.constant 0.000000e+00 : f32
    %178 = vector.broadcast %cst_96 : f32 to vector<40x64xf32>
    %179 = arith.maximumf %177, %178 : vector<40x64xf32>
    %180 = arith.truncf %179 : vector<40x64xf32> to vector<40x64xbf16>
    %c0_97 = arith.constant 0 : index
    %c0_98 = arith.constant 0 : index
    %181 = vector.load %arg7[%c0_97, %c0_98] : memref<64x64xbf16, #tpu.memory_space<vmem>>, vector<64x64xbf16>
    %cst_99 = arith.constant dense<0.000000e+00> : vector<40x64xf32>
    %182 = tpu.matmul %180, %181, %cst_99 {dimension_numbers = #tpu.dot_dimension_numbers<[1], [0], [0], [1], [0, 0, 1, 1], [], []>} : vector<40x64xbf16>, vector<64x64xbf16>, vector<40x64xf32> -> vector<40x64xf32>
    %c0_100 = arith.constant 0 : index
    %c0_101 = arith.constant 0 : index
    %183 = vector.load %arg8[%c0_100, %c0_101] : memref<1x64xf32, #tpu.memory_space<vmem>>, vector<1x64xf32>
    %184 = vector.broadcast %183 : vector<1x64xf32> to vector<40x64xf32>
    %185 = arith.addf %182, %184 : vector<40x64xf32>
    %cst_102 = arith.constant 0.000000e+00 : f32
    %186 = vector.broadcast %cst_102 : f32 to vector<40x64xf32>
    %187 = arith.maximumf %185, %186 : vector<40x64xf32>
    %c7_i32 = arith.constant 7 : i32
    %188 = vector.broadcast %c7_i32 : i32 to vector<40x1xi32>
    %189 = arith.cmpi sgt, %0, %188 : vector<40x1xi32>
    %190 = arith.extui %189 : vector<40x1xi1> to vector<40x1xi32>
    %191 = arith.sitofp %190 : vector<40x1xi32> to vector<40x1xf32>
    %192 = vector.broadcast %191 : vector<40x1xf32> to vector<40x64xf32>
    %193 = arith.mulf %187, %192 : vector<40x64xf32>
    %194 = arith.maximumf %170, %193 : vector<40x64xf32>
    %195 = arith.truncf %194 : vector<40x64xf32> to vector<40x64xbf16>
    %c0_103 = arith.constant 0 : index
    %c0_104 = arith.constant 0 : index
    %196 = vector.load %arg9[%c0_103, %c0_104] : memref<64x64xbf16, #tpu.memory_space<vmem>>, vector<64x64xbf16>
    %cst_105 = arith.constant dense<0.000000e+00> : vector<40x64xf32>
    %197 = tpu.matmul %195, %196, %cst_105 {dimension_numbers = #tpu.dot_dimension_numbers<[1], [0], [0], [1], [0, 0, 1, 1], [], []>} : vector<40x64xbf16>, vector<64x64xbf16>, vector<40x64xf32> -> vector<40x64xf32>
    %c0_106 = arith.constant 0 : index
    %c0_107 = arith.constant 0 : index
    %198 = vector.load %arg10[%c0_106, %c0_107] : memref<1x64xf32, #tpu.memory_space<vmem>>, vector<1x64xf32>
    %199 = vector.broadcast %198 : vector<1x64xf32> to vector<40x64xf32>
    %200 = arith.addf %197, %199 : vector<40x64xf32>
    %cst_108 = arith.constant 0.000000e+00 : f32
    %201 = vector.broadcast %cst_108 : f32 to vector<40x64xf32>
    %202 = arith.maximumf %200, %201 : vector<40x64xf32>
    %c0_109 = arith.constant 0 : index
    %c0_110 = arith.constant 0 : index
    %203 = vector.load %arg11[%c0_109, %c0_110] : memref<40x64xf32, #tpu.memory_space<vmem>>, vector<40x64xf32>
    tpu.vector_store %arg11[%c0_109, %c0_110], %202 {strides = array<i32>} : memref<40x64xf32, #tpu.memory_space<vmem>>, vector<40x64xf32>,
    return
  }
  func.func @transform_0(%arg0: i32) -> (i32, i32) {
    %c0_i32 = arith.constant 0 : i32
    %c0_i32_0 = arith.constant 0 : i32
    return %arg0, %c0_i32 : i32, i32
  }
  func.func @transform_1(%arg0: i32) -> (i32, i32) {
    %c0_i32 = arith.constant 0 : i32
    %c0_i32_0 = arith.constant 0 : i32
    return %arg0, %c0_i32 : i32, i32
  }
  func.func @transform_2(%arg0: i32) -> (i32, i32) {
    %c0_i32 = arith.constant 0 : i32
    %c0_i32_0 = arith.constant 0 : i32
    return %arg0, %c0_i32 : i32, i32
  }
  func.func @transform_3(%arg0: i32) -> (i32, i32) {
    %c0_i32 = arith.constant 0 : i32
    %c0_i32_0 = arith.constant 0 : i32
    %c0_i32_1 = arith.constant 0 : i32
    return %c0_i32, %c0_i32_0 : i32, i32
  }
  func.func @transform_4(%arg0: i32) -> (i32, i32) {
    %c0_i32 = arith.constant 0 : i32
    %c0_i32_0 = arith.constant 0 : i32
    %c0_i32_1 = arith.constant 0 : i32
    return %c0_i32, %c0_i32_0 : i32, i32
  }
  func.func @transform_5(%arg0: i32) -> (i32, i32) {
    %c0_i32 = arith.constant 0 : i32
    %c0_i32_0 = arith.constant 0 : i32
    %c0_i32_1 = arith.constant 0 : i32
    return %c0_i32, %c0_i32_0 : i32, i32
  }
  func.func @transform_6(%arg0: i32) -> (i32, i32) {
    %c0_i32 = arith.constant 0 : i32
    %c0_i32_0 = arith.constant 0 : i32
    %c0_i32_1 = arith.constant 0 : i32
    return %c0_i32, %c0_i32_0 : i32, i32
  }
  func.func @transform_7(%arg0: i32) -> (i32, i32) {
    %c0_i32 = arith.constant 0 : i32
    %c0_i32_0 = arith.constant 0 : i32
    %c0_i32_1 = arith.constant 0 : i32
    return %c0_i32, %c0_i32_0 : i32, i32
  }
  func.func @transform_8(%arg0: i32) -> (i32, i32) {
    %c0_i32 = arith.constant 0 : i32
    %c0_i32_0 = arith.constant 0 : i32
    %c0_i32_1 = arith.constant 0 : i32
    return %c0_i32, %c0_i32_0 : i32, i32
  }
  func.func @transform_9(%arg0: i32) -> (i32, i32) {
    %c0_i32 = arith.constant 0 : i32
    %c0_i32_0 = arith.constant 0 : i32
    %c0_i32_1 = arith.constant 0 : i32
    return %c0_i32, %c0_i32_0 : i32, i32
  }
  func.func @transform_10(%arg0: i32) -> (i32, i32) {
    %c0_i32 = arith.constant 0 : i32
    %c0_i32_0 = arith.constant 0 : i32
    return %arg0, %c0_i32 : i32, i32
  }
}

</mosaic_0001>

<llo_original>
// kernel: tpu_custom_call.1
$region0: #{tpu_custom_call.1}
  #allocation0 [shape = 'u32[]', space=smem, size = 0x4, offset = 0x4, fixed_abs, tag = 'smem constant byte address 0x4 - core index']
  #allocation1 [shape = 'u32[144,128]{1,0:T(1,128)}', space=vmem, size = 0x12000, scoped, tag = 'internal scratch']
  %s0 = inlined_call_operand.vmem [shape: bf16[320,8], index: 0, kind: input, shape index: {}]
  %s1 = inlined_call_operand.vmem [shape: bf16[320,8], index: 1, kind: input, shape index: {}]
  %s2 = inlined_call_operand.vmem [shape: s32[40,1], index: 2, kind: input, shape index: {}]
  %s3 = inlined_call_operand.vmem [shape: bf16[8,64], index: 3, kind: input, shape index: {}]
  %s4 = inlined_call_operand.vmem [shape: bf16[8,64], index: 4, kind: input, shape index: {}]
  %s5 = inlined_call_operand.vmem [shape: f32[1,64], index: 5, kind: input, shape index: {}]
  %s6 = inlined_call_operand.vmem [shape: bf16[64,64], index: 6, kind: input, shape index: {}]
  %s7 = inlined_call_operand.vmem [shape: f32[1,64], index: 7, kind: input, shape index: {}]
  %s8 = inlined_call_operand.vmem [shape: bf16[64,64], index: 8, kind: input, shape index: {}]
  %s9 = inlined_call_operand.vmem [shape: f32[1,64], index: 9, kind: input, shape index: {}]
  %s10 = inlined_call_operand.hbm [shape: f32[40,64], index: 10, kind: output, shape index: {}]
  %s11 = sld [smem:[#allocation0]]
  $region50: #{tpu_custom_call.1} parent=0
    _
  %s13 = ssub.s32 1, %s11
  %s14 = scalar_select 0, %s13, %s11
  $region1: #{tpu_custom_call.1} parent=0
    #allocation2 [shape = 'u8[20480]{0}', space=vmem, size = 0x5000, scoped, tag = 'output window, operand 0, single buffered']
    #allocation3 [shape = 's32[1]{0}', space=sflag, size = 0x4, scoped, tag = 'scoped memory for tpu_custom_call.1']
    %15 = vsyncpa [#allocation3], 0
    // Predicated region
    $region2: #{tpu_custom_call.1} parent=1 // pred_check
      _
    $region3: #{tpu_custom_call.1} parent=1 // pred_check_branch
      %17 = sbr.rel (0) target = $region5
    $region4: #{tpu_custom_call.1} parent=1 // pred_region
      _
    $region5: #{tpu_custom_call.1} parent=1 // pred_fallthru
      _
    // Predicated region
    $region6: #{tpu_custom_call.1} parent=1 // pred_check
      _
    $region7: #{tpu_custom_call.1} parent=1 // pred_check_branch
      %19 = sbr.rel (0) target = $region9
    $region8: #{tpu_custom_call.1} parent=1 // pred_region
      _
    $region9: #{tpu_custom_call.1} parent=1 // pred_fallthru
      _
    // Predicated region
    $region10: #{tpu_custom_call.1} parent=1 // pred_check
      _
    $region11: #{tpu_custom_call.1} parent=1 // pred_check_branch
      %21 = sbr.rel (0) target = $region13
    $region12: #{tpu_custom_call.1} parent=1 // pred_region
      _
    $region13: #{tpu_custom_call.1} parent=1 // pred_fallthru
      _
    // Predicated region
    $region14: #{tpu_custom_call.1} parent=1 // pred_check
      _
    $region15: #{tpu_custom_call.1} parent=1 // pred_check_branch
      %23 = sbr.rel (0) target = $region17
    $region16: #{tpu_custom_call.1} parent=1 // pred_region
      _
    $region17: #{tpu_custom_call.1} parent=1 // pred_fallthru
      _
    // Predicated region
    $region18: #{tpu_custom_call.1} parent=1 // pred_check
      _
    $region19: #{tpu_custom_call.1} parent=1 // pred_check_branch
      %25 = sbr.rel (0) target = $region21
    $region20: #{tpu_custom_call.1} parent=1 // pred_region
      _
    $region21: #{tpu_custom_call.1} parent=1 // pred_fallthru
      _
    // Predicated region
    $region22: #{tpu_custom_call.1} parent=1 // pred_check
      _
    $region23: #{tpu_custom_call.1} parent=1 // pred_check_branch
      %27 = sbr.rel (0) target = $region25
    $region24: #{tpu_custom_call.1} parent=1 // pred_region
      _
    $region25: #{tpu_custom_call.1} parent=1 // pred_fallthru
      _
    // Predicated region
    $region26: #{tpu_custom_call.1} parent=1 // pred_check
      _
    $region27: #{tpu_custom_call.1} parent=1 // pred_check_branch
      %29 = sbr.rel (0) target = $region29
    $region28: #{tpu_custom_call.1} parent=1 // pred_region
      _
    $region29: #{tpu_custom_call.1} parent=1 // pred_fallthru
      _
    // Predicated region
    $region30: #{tpu_custom_call.1} parent=1 // pred_check
      _
    $region31: #{tpu_custom_call.1} parent=1 // pred_check_branch
      %31 = sbr.rel (0) target = $region33
    $region32: #{tpu_custom_call.1} parent=1 // pred_region
      _
    $region33: #{tpu_custom_call.1} parent=1 // pred_fallthru
      _
    // Predicated region
    $region34: #{tpu_custom_call.1} parent=1 // pred_check
      _
    $region35: #{tpu_custom_call.1} parent=1 // pred_check_branch
      %33 = sbr.rel (0) target = $region37
    $region36: #{tpu_custom_call.1} parent=1 // pred_region
      _
    $region37: #{tpu_custom_call.1} parent=1 // pred_fallthru
      _
    // Predicated region
    $region38: #{tpu_custom_call.1} parent=1 // pred_check
      _
    $region39: #{tpu_custom_call.1} parent=1 // pred_check_branch
      %35 = sbr.rel (0) target = $region41
    $region40: #{tpu_custom_call.1} parent=1 // pred_region
      _
    $region41: #{tpu_custom_call.1} parent=1 // pred_fallthru
      _
    %v37 = vld [vmem:[%s2] sm:$0xff]
    %v38 = vld [vmem:[%s2 + $0x8] sm:$0xff]
    %v39 = vld [vmem:[%s2 + $0x10] sm:$0xff]
    %v40 = vld [vmem:[%s2 + $0x18] sm:$0xff]
    %v41 = vld [vmem:[%s2 + $0x20] sm:$0xff]
    %v42 = vld [vmem:[%s3] sm:$0xf]
    %v43 = vld [vmem:[%s4] sm:$0xf]
    %v44 = vld [vmem:[%s5] sm:$0x1]
    %v45 = vld [vmem:[%s0] sm:$0xf]
    %v46 = vld [vmem:[%s0 + $0x4] sm:$0xf]
    %v47 = vld [vmem:[%s0 + $0x8] sm:$0xf]
    %v48 = vld [vmem:[%s0 + $0xc] sm:$0xf]
    %v49 = vld [vmem:[%s0 + $0x10] sm:$0xf]
    %v50 = vld [vmem:[%s1] sm:$0xf]
    %v51 = vld [vmem:[%s1 + $0x4] sm:$0xf]
    %v52 = vld [vmem:[%s1 + $0x8] sm:$0xf]
    %v53 = vld [vmem:[%s1 + $0xc] sm:$0xf]
    %v54 = vld [vmem:[%s1 + $0x10] sm:$0xf]
    %v60 = vunpack.c.l.b16 %v50
    %v61 = vunpack.c.l.b16 %v51
    %v62 = vunpack.c.l.b16 %v52
    %v63 = vunpack.c.l.b16 %v53
    %v64 = vunpack.c.l.b16 %v54
    %v65 = vpack.c.b16 %v61, %v60
    %v66 = vpack.c.b16 %v63, %v62
    %v67 = vpack.c.b16 %v64, %v64
    %vm68 = vcmask 64512
    %v70 = vsel %vm68, %v65, 0
    %v73 = vsel %vm68, %v66, 0
    %v76 = vsel %vm68, %v67, 0
    %vm78 = vcmask 1043456
    %v80 = vsel %vm78, %v43, 0
    %82 = vmatprep.subr.bf16.mxu0 0
    %83 = vmatpush1.bf16.msra.mxu0 %v80
    %84 = vmatprep.subr.bf16.mxu0 0
    %85 = vmatpush1.bf16.msra.mxu0 0
    %86 = vmatprep.subr.bf16.mxu0 0
    %87 = vmatpush1.bf16.msra.mxu0 0
    %88 = vmatprep.subr.bf16.mxu0 0
    %89 = vmatpush1.bf16.msra.mxu0 0
    %90 = vmatprep.subr.bf16.mxu0 0
    %91 = vmatpush1.bf16.msra.mxu0 0
    %92 = vmatprep.subr.bf16.mxu0 0
    %93 = vmatpush1.bf16.msra.mxu0 0
    %94 = vmatprep.subr.bf16.mxu0 0
    %95 = vmatpush1.bf16.msra.mxu0 0
    %96 = vmatprep.subr.bf16.mxu0 0
    %97 = vmatpush1.bf16.msra.mxu0 0
    %98 = vmatprep.subr.bf16.mxu0 0
    %99 = vmatpush1.bf16.msra.mxu0 0
    %100 = vmatprep.subr.bf16.mxu0 0
    %101 = vmatpush1.bf16.msra.mxu0 0
    %102 = vmatprep.subr.bf16.mxu0 0
    %103 = vmatpush1.bf16.msra.mxu0 0
    %104 = vmatprep.subr.bf16.mxu0 0
    %105 = vmatpush1.bf16.msra.mxu0 0
    %106 = vmatprep.subr.bf16.mxu0 0
    %107 = vmatpush1.bf16.msra.mxu0 0
    %108 = vmatprep.subr.bf16.mxu0 0
    %109 = vmatpush1.bf16.msra.mxu0 0
    %110 = vmatprep.subr.bf16.mxu0 0
    %111 = vmatpush1.bf16.msra.mxu0 0
    %112 = vmatprep.subr.bf16.mxu0 0
    %113 = vmatpush1.bf16.msra.mxu0 0
    %114 = vmatprep.mubr.bf16.mxu0 0
    %115 = vmatmul.mubr.bf16.gmra.mrb[0].mxu0 %v70
    %v116 = vpop.f32.mrb[0].mxu0
    %v117 = vadd.f32 0.0, %v116
    %v118 = vpop.f32.mrb[0].mxu0
    %v119 = vpop.f32.mrb[0].mxu0
    %v120 = vadd.f32 0.0, %v119
    %v121 = vpop.f32.mrb[0].mxu0
    %122 = vmatprep.mubr.bf16.mxu0 0
    %123 = vmatmul.mubr.bf16.gmra.mrb[0].mxu0 %v73
    %v124 = vpop.f32.mrb[0].mxu0
    %v125 = vadd.f32 0.0, %v124
    %v126 = vpop.f32.mrb[0].mxu0
    %v127 = vpop.f32.mrb[0].mxu0
    %v128 = vadd.f32 0.0, %v127
    %v129 = vpop.f32.mrb[0].mxu0
    %130 = vmatprep.mubr.bf16.mxu0 0
    %131 = vmatmul.mubr.bf16.gmra.mrb[0].mxu0 %v76
    %v132 = vpop.f32.mrb[0].mxu0
    %v133 = vadd.f32 0.0, %v132
    %v134 = vpop.f32.mrb[0].mxu0
    %v135 = vpop.f32.mrb[0].mxu0
    %v136 = vpop.f32.mrb[0].mxu0
    %137 = vdwg.mxu0
    %v143 = vunpack.c.l.b16 %v45
    %v144 = vunpack.c.l.b16 %v46
    %v145 = vunpack.c.l.b16 %v47
    %v146 = vunpack.c.l.b16 %v48
    %v147 = vunpack.c.l.b16 %v49
    %v148 = vpack.c.b16 %v144, %v143
    %v149 = vpack.c.b16 %v146, %v145
    %v150 = vpack.c.b16 %v147, %v147
    %v152 = vsel %vm68, %v148, 0
    %v155 = vsel %vm68, %v149, 0
    %v158 = vsel %vm68, %v150, 0
    %v161 = vsel %vm78, %v42, 0
    %163 = vmatprep.subr.bf16.mxu0 0
    %164 = vmatpush1.bf16.msra.mxu0 %v161
    %165 = vmatprep.subr.bf16.mxu0 0
    %166 = vmatpush1.bf16.msra.mxu0 0
    %167 = vmatprep.subr.bf16.mxu0 0
    %168 = vmatpush1.bf16.msra.mxu0 0
    %169 = vmatprep.subr.bf16.mxu0 0
    %170 = vmatpush1.bf16.msra.mxu0 0
    %171 = vmatprep.subr.bf16.mxu0 0
    %172 = vmatpush1.bf16.msra.mxu0 0
    %173 = vmatprep.subr.bf16.mxu0 0
    %174 = vmatpush1.bf16.msra.mxu0 0
    %175 = vmatprep.subr.bf16.mxu0 0
    %176 = vmatpush1.bf16.msra.mxu0 0
    %177 = vmatprep.subr.bf16.mxu0 0
    %178 = vmatpush1.bf16.msra.mxu0 0
    %179 = vmatprep.subr.bf16.mxu0 0
    %180 = vmatpush1.bf16.msra.mxu0 0
    %181 = vmatprep.subr.bf16.mxu0 0
    %182 = vmatpush1.bf16.msra.mxu0 0
    %183 = vmatprep.subr.bf16.mxu0 0
    %184 = vmatpush1.bf16.msra.mxu0 0
    %185 = vmatprep.subr.bf16.mxu0 0
    %186 = vmatpush1.bf16.msra.mxu0 0
    %187 = vmatprep.subr.bf16.mxu0 0
    %188 = vmatpush1.bf16.msra.mxu0 0
    %189 = vmatprep.subr.bf16.mxu0 0
    %190 = vmatpush1.bf16.msra.mxu0 0
    %191 = vmatprep.subr.bf16.mxu0 0
    %192 = vmatpush1.bf16.msra.mxu0 0
    %193 = vmatprep.subr.bf16.mxu0 0
    %194 = vmatpush1.bf16.msra.mxu0 0
    %195 = vmatprep.mubr.bf16.mxu0 0
    %196 = vmatmul.mubr.bf16.gmra.mrb[0].mxu0 %v152
    %v197 = vpop.f32.mrb[0].mxu0
    %v198 = vadd.f32 %v117, %v197
    %v199 = vpop.f32.mrb[0].mxu0
    %v200 = vpop.f32.mrb[0].mxu0
    %v201 = vadd.f32 %v120, %v200
    %v202 = vpop.f32.mrb[0].mxu0
    %203 = vmatprep.mubr.bf16.mxu0 0
    %204 = vmatmul.mubr.bf16.gmra.mrb[0].mxu0 %v155
    %v205 = vpop.f32.mrb[0].mxu0
    %v206 = vadd.f32 %v125, %v205
    %v207 = vpop.f32.mrb[0].mxu0
    %v208 = vpop.f32.mrb[0].mxu0
    %v209 = vadd.f32 %v128, %v208
    %v210 = vpop.f32.mrb[0].mxu0
    %211 = vmatprep.mubr.bf16.mxu0 0
    %212 = vmatmul.mubr.bf16.gmra.mrb[0].mxu0 %v158
    %v213 = vpop.f32.mrb[0].mxu0
    %v214 = vadd.f32 %v133, %v213
    %v215 = vpop.f32.mrb[0].mxu0
    %v216 = vpop.f32.mrb[0].mxu0
    %v217 = vpop.f32.mrb[0].mxu0
    %218 = vdwg.mxu0
    %v220 = vlaneseq
    %v221 = vshrl.u32 %v220, 7
    %v222 = vsub.s32 0, %v221
    %v223 = vrot.slane %v44, %v222
    %v225 = vadd.f32 %v198, %v223
    %v226 = vadd.f32 %v201, %v223
    %v227 = vadd.f32 %v206, %v223
    %v228 = vadd.f32 %v209, %v223
    %v229 = vadd.f32 %v214, %v223
    %v230 = vmax.f32 %v225, 0.0
    %v231 = vmax.f32 %v226, 0.0
    %v232 = vmax.f32 %v227, 0.0
    %v233 = vmax.f32 %v228, 0.0
    %v234 = vmax.f32 %v229, 0.0
    %v235 = vpack.c.bf16 %v231, %v230
    %v236 = vpack.c.bf16 %v233, %v232
    %v237 = vpack.c.bf16 %v234, %v234
    %v238 = vld [vmem:[%s6] sm:$0xf]
    %v239 = vld [vmem:[%s6 + $0x4] sm:$0xf]
    %v240 = vld [vmem:[%s6 + $0x8] sm:$0xf]
    %v241 = vld [vmem:[%s6 + $0xc] sm:$0xf]
    %v242 = vld [vmem:[%s6 + $0x10] sm:$0xf]
    %v243 = vld [vmem:[%s6 + $0x14] sm:$0xf]
    %v244 = vld [vmem:[%s6 + $0x18] sm:$0xf]
    %v245 = vld [vmem:[%s6 + $0x1c] sm:$0xf]
    %v246 = vld [vmem:[%s7] sm:$0x1]
    %v248 = vlaneseq
    %v249 = vshrl.u32 %v248, 7
    %v250 = vsub.s32 0, %v249
    %v251 = vrot.slane %v246, %v250
    %v261 = vunpack.c.l.b16 %v238
    %v262 = vunpack.c.l.b16 %v239
    %v263 = vunpack.c.l.b16 %v240
    %v264 = vunpack.c.l.b16 %v241
    %v265 = vunpack.c.l.b16 %v242
    %v266 = vunpack.c.l.b16 %v243
    %v267 = vunpack.c.l.b16 %v244
    %v268 = vunpack.c.l.b16 %v245
    %v269 = vpack.c.b16 %v262, %v261
    %v270 = vpack.c.b16 %v264, %v263
    %v271 = vpack.c.b16 %v266, %v265
    %v272 = vpack.c.b16 %v268, %v267
    %vm277 = vcmask 523264
    %v279 = vsel %vm277, %v235, 0
    %v282 = vsel %vm277, %v236, 0
    %v285 = vsel %vm277, %v237, 0
    %287 = vmatprep.subr.bf16.mxu0 0
    %288 = vmatpush1.bf16.msra.mxu0 %v269
    %289 = vmatprep.subr.bf16.mxu0 0
    %290 = vmatpush1.bf16.msra.mxu0 %v270
    %291 = vmatprep.subr.bf16.mxu0 0
    %292 = vmatpush1.bf16.msra.mxu0 %v271
    %293 = vmatprep.subr.bf16.mxu0 0
    %294 = vmatpush1.bf16.msra.mxu0 %v272
    %295 = vmatprep.subr.bf16.mxu0 0
    %296 = vmatpush1.bf16.msra.mxu0 0
    %297 = vmatprep.subr.bf16.mxu0 0
    %298 = vmatpush1.bf16.msra.mxu0 0
    %299 = vmatprep.subr.bf16.mxu0 0
    %300 = vmatpush1.bf16.msra.mxu0 0
    %301 = vmatprep.subr.bf16.mxu0 0
    %302 = vmatpush1.bf16.msra.mxu0 0
    %303 = vmatprep.subr.bf16.mxu0 0
    %304 = vmatpush1.bf16.msra.mxu0 0
    %305 = vmatprep.subr.bf16.mxu0 0
    %306 = vmatpush1.bf16.msra.mxu0 0
    %307 = vmatprep.subr.bf16.mxu0 0
    %308 = vmatpush1.bf16.msra.mxu0 0
    %309 = vmatprep.subr.bf16.mxu0 0
    %310 = vmatpush1.bf16.msra.mxu0 0
    %311 = vmatprep.subr.bf16.mxu0 0
    %312 = vmatpush1.bf16.msra.mxu0 0
    %313 = vmatprep.subr.bf16.mxu0 0
    %314 = vmatpush1.bf16.msra.mxu0 0
    %315 = vmatprep.subr.bf16.mxu0 0
    %316 = vmatpush1.bf16.msra.mxu0 0
    %317 = vmatprep.subr.bf16.mxu0 0
    %318 = vmatpush1.bf16.msra.mxu0 0
    %319 = vmatprep.mubr.bf16.mxu0 0
    %320 = vmatmul.mubr.bf16.gmra.mrb[0].mxu0 %v279
    %v321 = vpop.f32.mrb[0].mxu0
    %v322 = vadd.f32 %v251, %v321
    %v323 = vpop.f32.mrb[0].mxu0
    %v324 = vpop.f32.mrb[0].mxu0
    %v325 = vadd.f32 %v251, %v324
    %v326 = vpop.f32.mrb[0].mxu0
    %327 = vmatprep.mubr.bf16.mxu0 0
    %328 = vmatmul.mubr.bf16.gmra.mrb[0].mxu0 %v282
    %v329 = vpop.f32.mrb[0].mxu0
    %v330 = vadd.f32 %v251, %v329
    %v331 = vpop.f32.mrb[0].mxu0
    %v332 = vpop.f32.mrb[0].mxu0
    %v333 = vadd.f32 %v251, %v332
    %v334 = vpop.f32.mrb[0].mxu0
    %335 = vmatprep.mubr.bf16.mxu0 0
    %336 = vmatmul.mubr.bf16.gmra.mrb[0].mxu0 %v285
    %v337 = vpop.f32.mrb[0].mxu0
    %v338 = vadd.f32 %v251, %v337
    %v339 = vpop.f32.mrb[0].mxu0
    %v340 = vpop.f32.mrb[0].mxu0
    %v341 = vpop.f32.mrb[0].mxu0
    %342 = vdwg.mxu0
    %v343 = vmax.f32 %v322, 0.0
    %v344 = vmax.f32 %v325, 0.0
    %v345 = vmax.f32 %v330, 0.0
    %v346 = vmax.f32 %v333, 0.0
    %v347 = vmax.f32 %v338, 0.0
    %vm348 = vcmp.gt.s32.totalorder %v37, 0
    %vm349 = vcmp.gt.s32.totalorder %v38, 0
    %vm350 = vcmp.gt.s32.totalorder %v39, 0
    %vm351 = vcmp.gt.s32.totalorder %v40, 0
    %vm352 = vcmp.gt.s32.totalorder %v41, 0
    %v353 = vsel %vm348, 1, 0
    %v354 = vsel %vm349, 1, 0
    %v355 = vsel %vm350, 1, 0
    %v356 = vsel %vm351, 1, 0
    %v357 = vsel %vm352, 1, 0
    %v358 = vcvt.s32.f32 %v353
    %v359 = vcvt.s32.f32 %v354
    %v360 = vcvt.s32.f32 %v355
    %v361 = vcvt.s32.f32 %v356
    %v362 = vcvt.s32.f32 %v357
    %364 = vset.pattern.permute.xlu0 0
    %365 = vperm.xlu0 %364, %v358
    %v366 = vpop.permute.xlu0 %365
    %369 = vset.pattern.permute.xlu0 0
    %370 = vperm.xlu0 %369, %v359
    %v371 = vpop.permute.xlu0 %370
    %374 = vset.pattern.permute.xlu0 0
    %375 = vperm.xlu0 %374, %v360
    %v376 = vpop.permute.xlu0 %375
    %379 = vset.pattern.permute.xlu0 0
    %380 = vperm.xlu0 %379, %v361
    %v381 = vpop.permute.xlu0 %380
    %384 = vset.pattern.permute.xlu0 0
    %385 = vperm.xlu0 %384, %v362
    %v386 = vpop.permute.xlu0 %385
    %v388 = vmul.f32 %v343, %v366
    %v389 = vmul.f32 %v344, %v371
    %v390 = vmul.f32 %v345, %v376
    %v391 = vmul.f32 %v346, %v381
    %v392 = vmul.f32 %v347, %v386
    %v393 = vld [vmem:[%s0 + $0x14] sm:$0xf]
    %v394 = vld [vmem:[%s0 + $0x18] sm:$0xf]
    %v395 = vld [vmem:[%s0 + $0x1c] sm:$0xf]
    %v396 = vld [vmem:[%s0 + $0x20] sm:$0xf]
    %v397 = vld [vmem:[%s0 + $0x24] sm:$0xf]
    %v398 = vld [vmem:[%s1 + $0x14] sm:$0xf]
    %v399 = vld [vmem:[%s1 + $0x18] sm:$0xf]
    %v400 = vld [vmem:[%s1 + $0x1c] sm:$0xf]
    %v401 = vld [vmem:[%s1 + $0x20] sm:$0xf]
    %v402 = vld [vmem:[%s1 + $0x24] sm:$0xf]
    %v408 = vunpack.c.l.b16 %v398
    %v409 = vunpack.c.l.b16 %v399
    %v410 = vunpack.c.l.b16 %v400
    %v411 = vunpack.c.l.b16 %v401
    %v412 = vunpack.c.l.b16 %v402
    %v413 = vpack.c.b16 %v409, %v408
    %v414 = vpack.c.b16 %v411, %v410
    %v415 = vpack.c.b16 %v412, %v412
    %v417 = vsel %vm68, %v413, 0
    %v420 = vsel %vm68, %v414, 0
    %v423 = vsel %vm68, %v415, 0
    %425 = vmatprep.subr.bf16.mxu0 0
    %426 = vmatpush1.bf16.msra.mxu0 %v80
    %427 = vmatprep.subr.bf16.mxu0 0
    %428 = vmatpush1.bf16.msra.mxu0 0
    %429 = vmatprep.subr.bf16.mxu0 0
    %430 = vmatpush1.bf16.msra.mxu0 0
    %431 = vmatprep.subr.bf16.mxu0 0
    %432 = vmatpush1.bf16.msra.mxu0 0
    %433 = vmatprep.subr.bf16.mxu0 0
    %434 = vmatpush1.bf16.msra.mxu0 0
    %435 = vmatprep.subr.bf16.mxu0 0
    %436 = vmatpush1.bf16.msra.mxu0 0
    %437 = vmatprep.subr.bf16.mxu0 0
    %438 = vmatpush1.bf16.msra.mxu0 0
    %439 = vmatprep.subr.bf16.mxu0 0
    %440 = vmatpush1.bf16.msra.mxu0 0
    %441 = vmatprep.subr.bf16.mxu0 0
    %442 = vmatpush1.bf16.msra.mxu0 0
    %443 = vmatprep.subr.bf16.mxu0 0
    %444 = vmatpush1.bf16.msra.mxu0 0
    %445 = vmatprep.subr.bf16.mxu0 0
    %446 = vmatpush1.bf16.msra.mxu0 0
    %447 = vmatprep.subr.bf16.mxu0 0
    %448 = vmatpush1.bf16.msra.mxu0 0
    %449 = vmatprep.subr.bf16.mxu0 0
    %450 = vmatpush1.bf16.msra.mxu0 0
    %451 = vmatprep.subr.bf16.mxu0 0
    %452 = vmatpush1.bf16.msra.mxu0 0
    %453 = vmatprep.subr.bf16.mxu0 0
    %454 = vmatpush1.bf16.msra.mxu0 0
    %455 = vmatprep.subr.bf16.mxu0 0
    %456 = vmatpush1.bf16.msra.mxu0 0
    %457 = vmatprep.mubr.bf16.mxu0 0
    %458 = vmatmul.mubr.bf16.gmra.mrb[0].mxu0 %v417
    %v459 = vpop.f32.mrb[0].mxu0
    %v460 = vadd.f32 0.0, %v459
    %v461 = vpop.f32.mrb[0].mxu0
    %v462 = vpop.f32.mrb[0].mxu0
    %v463 = vadd.f32 0.0, %v462
    %v464 = vpop.f32.mrb[0].mxu0
    %465 = vmatprep.mubr.bf16.mxu0 0
    %466 = vmatmul.mubr.bf16.gmra.mrb[0].mxu0 %v420
    %v467 = vpop.f32.mrb[0].mxu0
    %v468 = vadd.f32 0.0, %v467
    %v469 = vpop.f32.mrb[0].mxu0
    %v470 = vpop.f32.mrb[0].mxu0
    %v471 = vadd.f32 0.0, %v470
    %v472 = vpop.f32.mrb[0].mxu0
    %473 = vmatprep.mubr.bf16.mxu0 0
    %474 = vmatmul.mubr.bf16.gmra.mrb[0].mxu0 %v423
    %v475 = vpop.f32.mrb[0].mxu0
    %v476 = vadd.f32 0.0, %v475
    %v477 = vpop.f32.mrb[0].mxu0
    %v478 = vpop.f32.mrb[0].mxu0
    %v479 = vpop.f32.mrb[0].mxu0
    %480 = vdwg.mxu0
    %v486 = vunpack.c.l.b16 %v393
    %v487 = vunpack.c.l.b16 %v394
    %v488 = vunpack.c.l.b16 %v395
    %v489 = vunpack.c.l.b16 %v396
    %v490 = vunpack.c.l.b16 %v397
    %v491 = vpack.c.b16 %v487, %v486
    %v492 = vpack.c.b16 %v489, %v488
    %v493 = vpack.c.b16 %v490, %v490
    %v495 = vsel %vm68, %v491, 0
    %v498 = vsel %vm68, %v492, 0
    %v501 = vsel %vm68, %v493, 0
    %503 = vmatprep.subr.bf16.mxu0 0
    %504 = vmatpush1.bf16.msra.mxu0 %v161
    %505 = vmatprep.subr.bf16.mxu0 0
    %506 = vmatpush1.bf16.msra.mxu0 0
    %507 = vmatprep.subr.bf16.mxu0 0
    %508 = vmatpush1.bf16.msra.mxu0 0
    %509 = vmatprep.subr.bf16.mxu0 0
    %510 = vmatpush1.bf16.msra.mxu0 0
    %511 = vmatprep.subr.bf16.mxu0 0
    %512 = vmatpush1.bf16.msra.mxu0 0
    %513 = vmatprep.subr.bf16.mxu0 0
    %514 = vmatpush1.bf16.msra.mxu0 0
    %515 = vmatprep.subr.bf16.mxu0 0
    %516 = vmatpush1.bf16.msra.mxu0 0
    %517 = vmatprep.subr.bf16.mxu0 0
    %518 = vmatpush1.bf16.msra.mxu0 0
    %519 = vmatprep.subr.bf16.mxu0 0
    %520 = vmatpush1.bf16.msra.mxu0 0
    %521 = vmatprep.subr.bf16.mxu0 0
    %522 = vmatpush1.bf16.msra.mxu0 0
    %523 = vmatprep.subr.bf16.mxu0 0
    %524 = vmatpush1.bf16.msra.mxu0 0
    %525 = vmatprep.subr.bf16.mxu0 0
    %526 = vmatpush1.bf16.msra.mxu0 0
    %527 = vmatprep.subr.bf16.mxu0 0
    %528 = vmatpush1.bf16.msra.mxu0 0
    %529 = vmatprep.subr.bf16.mxu0 0
    %530 = vmatpush1.bf16.msra.mxu0 0
    %531 = vmatprep.subr.bf16.mxu0 0
    %532 = vmatpush1.bf16.msra.mxu0 0
    %533 = vmatprep.subr.bf16.mxu0 0
    %534 = vmatpush1.bf16.msra.mxu0 0
    %535 = vmatprep.mubr.bf16.mxu0 0
    %536 = vmatmul.mubr.bf16.gmra.mrb[0].mxu0 %v495
    %v537 = vpop.f32.mrb[0].mxu0
    %v538 = vadd.f32 %v460, %v537
    %v539 = vpop.f32.mrb[0].mxu0
    %v540 = vpop.f32.mrb[0].mxu0
    %v541 = vadd.f32 %v463, %v540
    %v542 = vpop.f32.mrb[0].mxu0
    %543 = vmatprep.mubr.bf16.mxu0 0
    %544 = vmatmul.mubr.bf16.gmra.mrb[0].mxu0 %v498
    %v545 = vpop.f32.mrb[0].mxu0
    %v546 = vadd.f32 %v468, %v545
    %v547 = vpop.f32.mrb[0].mxu0
    %v548 = vpop.f32.mrb[0].mxu0
    %v549 = vadd.f32 %v471, %v548
    %v550 = vpop.f32.mrb[0].mxu0
    %551 = vmatprep.mubr.bf16.mxu0 0
    %552 = vmatmul.mubr.bf16.gmra.mrb[0].mxu0 %v501
    %v553 = vpop.f32.mrb[0].mxu0
    %v554 = vadd.f32 %v476, %v553
    %v555 = vpop.f32.mrb[0].mxu0
    %v556 = vpop.f32.mrb[0].mxu0
    %v557 = vpop.f32.mrb[0].mxu0
    %558 = vdwg.mxu0
    %v559 = vadd.f32 %v538, %v223
    %v560 = vadd.f32 %v541, %v223
    %v561 = vadd.f32 %v546, %v223
    %v562 = vadd.f32 %v549, %v223
    %v563 = vadd.f32 %v554, %v223
    %v564 = vmax.f32 %v559, 0.0
    %v565 = vmax.f32 %v560, 0.0
    %v566 = vmax.f32 %v561, 0.0
    %v567 = vmax.f32 %v562, 0.0
    %v568 = vmax.f32 %v563, 0.0
    %v569 = vpack.c.bf16 %v565, %v564
    %v570 = vpack.c.bf16 %v567, %v566
    %v571 = vpack.c.bf16 %v568, %v568
    %v573 = vsel %vm277, %v569, 0
    %v576 = vsel %vm277, %v570, 0
    %v579 = vsel %vm277, %v571, 0
    %581 = vmatprep.subr.bf16.mxu0 0
    %582 = vmatpush1.bf16.msra.mxu0 %v269
    %583 = vmatprep.subr.bf16.mxu0 0
    %584 = vmatpush1.bf16.msra.mxu0 %v270
    %585 = vmatprep.subr.bf16.mxu0 0
    %586 = vmatpush1.bf16.msra.mxu0 %v271
    %587 = vmatprep.subr.bf16.mxu0 0
    %588 = vmatpush1.bf16.msra.mxu0 %v272
    %589 = vmatprep.subr.bf16.mxu0 0
    %590 = vmatpush1.bf16.msra.mxu0 0
    %591 = vmatprep.subr.bf16.mxu0 0
    %592 = vmatpush1.bf16.msra.mxu0 0
    %593 = vmatprep.subr.bf16.mxu0 0
    %594 = vmatpush1.bf16.msra.mxu0 0
    %595 = vmatprep.subr.bf16.mxu0 0
    %596 = vmatpush1.bf16.msra.mxu0 0
    %597 = vmatprep.subr.bf16.mxu0 0
    %598 = vmatpush1.bf16.msra.mxu0 0
    %599 = vmatprep.subr.bf16.mxu0 0
    %600 = vmatpush1.bf16.msra.mxu0 0
    %601 = vmatprep.subr.bf16.mxu0 0
    %602 = vmatpush1.bf16.msra.mxu0 0
    %603 = vmatprep.subr.bf16.mxu0 0
    %604 = vmatpush1.bf16.msra.mxu0 0
    %605 = vmatprep.subr.bf16.mxu0 0
    %606 = vmatpush1.bf16.msra.mxu0 0
    %607 = vmatprep.subr.bf16.mxu0 0
    %608 = vmatpush1.bf16.msra.mxu0 0
    %609 = vmatprep.subr.bf16.mxu0 0
    %610 = vmatpush1.bf16.msra.mxu0 0
    %611 = vmatprep.subr.bf16.mxu0 0
    %612 = vmatpush1.bf16.msra.mxu0 0
    %613 = vmatprep.mubr.bf16.mxu0 0
    %614 = vmatmul.mubr.bf16.gmra.mrb[0].mxu0 %v573
    %v615 = vpop.f32.mrb[0].mxu0
    %v616 = vadd.f32 %v251, %v615
    %v617 = vpop.f32.mrb[0].mxu0
    %v618 = vpop.f32.mrb[0].mxu0
    %v619 = vadd.f32 %v251, %v618
    %v620 = vpop.f32.mrb[0].mxu0
    %621 = vmatprep.mubr.bf16.mxu0 0
    %622 = vmatmul.mubr.bf16.gmra.mrb[0].mxu0 %v576
    %v623 = vpop.f32.mrb[0].mxu0
    %v624 = vadd.f32 %v251, %v623
    %v625 = vpop.f32.mrb[0].mxu0
    %v626 = vpop.f32.mrb[0].mxu0
    %v627 = vadd.f32 %v251, %v626
    %v628 = vpop.f32.mrb[0].mxu0
    %629 = vmatprep.mubr.bf16.mxu0 0
    %630 = vmatmul.mubr.bf16.gmra.mrb[0].mxu0 %v579
    %v631 = vpop.f32.mrb[0].mxu0
    %v632 = vadd.f32 %v251, %v631
    %v633 = vpop.f32.mrb[0].mxu0
    %v634 = vpop.f32.mrb[0].mxu0
    %v635 = vpop.f32.mrb[0].mxu0
    %636 = vdwg.mxu0
    %v637 = vmax.f32 %v616, 0.0
    %v638 = vmax.f32 %v619, 0.0
    %v639 = vmax.f32 %v624, 0.0
    %v640 = vmax.f32 %v627, 0.0
    %v641 = vmax.f32 %v632, 0.0
    %vm642 = vcmp.gt.s32.totalorder %v37, 1
    %vm643 = vcmp.gt.s32.totalorder %v38, 1
    %vm644 = vcmp.gt.s32.totalorder %v39, 1
    %vm645 = vcmp.gt.s32.totalorder %v40, 1
    %vm646 = vcmp.gt.s32.totalorder %v41, 1
    %v647 = vsel %vm642, 1, 0
    %v648 = vsel %vm643, 1, 0
    %v649 = vsel %vm644, 1, 0
    %v650 = vsel %vm645, 1, 0
    %v651 = vsel %vm646, 1, 0
    %v652 = vcvt.s32.f32 %v647
    %v653 = vcvt.s32.f32 %v648
    %v654 = vcvt.s32.f32 %v649
    %v655 = vcvt.s32.f32 %v650
    %v656 = vcvt.s32.f32 %v651
    %658 = vset.pattern.permute.xlu0 0
    %659 = vperm.xlu0 %658, %v652
    %v660 = vpop.permute.xlu0 %659
    %663 = vset.pattern.permute.xlu0 0
    %664 = vperm.xlu0 %663, %v653
    %v665 = vpop.permute.xlu0 %664
    %668 = vset.pattern.permute.xlu0 0
    %669 = vperm.xlu0 %668, %v654
    %v670 = vpop.permute.xlu0 %669
    %673 = vset.pattern.permute.xlu0 0
    %674 = vperm.xlu0 %673, %v655
    %v675 = vpop.permute.xlu0 %674
    %678 = vset.pattern.permute.xlu0 0
    %679 = vperm.xlu0 %678, %v656
    %v680 = vpop.permute.xlu0 %679
    %v682 = vmul.f32 %v637, %v660
    %v683 = vmul.f32 %v638, %v665
    %v684 = vmul.f32 %v639, %v670
    %v685 = vmul.f32 %v640, %v675
    %v686 = vmul.f32 %v641, %v680
    %v687 = vmax.f32 %v388, %v682
    %v688 = vmax.f32 %v389, %v683
    %v689 = vmax.f32 %v390, %v684
    %v690 = vmax.f32 %v391, %v685
    %v691 = vmax.f32 %v392, %v686
    %v692 = vld [vmem:[%s0 + $0x28] sm:$0xf]
    %v693 = vld [vmem:[%s0 + $0x2c] sm:$0xf]
    %v694 = vld [vmem:[%s0 + $0x30] sm:$0xf]
    %v695 = vld [vmem:[%s0 + $0x34] sm:$0xf]
    %v696 = vld [vmem:[%s0 + $0x38] sm:$0xf]
    %v697 = vld [vmem:[%s1 + $0x28] sm:$0xf]
    %v698 = vld [vmem:[%s1 + $0x2c] sm:$0xf]
    %v699 = vld [vmem:[%s1 + $0x30] sm:$0xf]
    %v700 = vld [vmem:[%s1 + $0x34] sm:$0xf]
    %v701 = vld [vmem:[%s1 + $0x38] sm:$0xf]
    %v707 = vunpack.c.l.b16 %v697
    %v708 = vunpack.c.l.b16 %v698
    %v709 = vunpack.c.l.b16 %v699
    %v710 = vunpack.c.l.b16 %v700
    %v711 = vunpack.c.l.b16 %v701
    %v712 = vpack.c.b16 %v708, %v707
    %v713 = vpack.c.b16 %v710, %v709
    %v714 = vpack.c.b16 %v711, %v711
    %v716 = vsel %vm68, %v712, 0
    %v719 = vsel %vm68, %v713, 0
    %v722 = vsel %vm68, %v714, 0
    %724 = vmatprep.subr.bf16.mxu0 0
    %725 = vmatpush1.bf16.msra.mxu0 %v80
    %726 = vmatprep.subr.bf16.mxu0 0
    %727 = vmatpush1.bf16.msra.mxu0 0
    %728 = vmatprep.subr.bf16.mxu0 0
    %729 = vmatpush1.bf16.msra.mxu0 0
    %730 = vmatprep.subr.bf16.mxu0 0
    %731 = vmatpush1.bf16.msra.mxu0 0
    %732 = vmatprep.subr.bf16.mxu0 0
    %733 = vmatpush1.bf16.msra.mxu0 0
    %734 = vmatprep.subr.bf16.mxu0 0
    %735 = vmatpush1.bf16.msra.mxu0 0
    %736 = vmatprep.subr.bf16.mxu0 0
    %737 = vmatpush1.bf16.msra.mxu0 0
    %738 = vmatprep.subr.bf16.mxu0 0
    %739 = vmatpush1.bf16.msra.mxu0 0
    %740 = vmatprep.subr.bf16.mxu0 0
    %741 = vmatpush1.bf16.msra.mxu0 0
    %742 = vmatprep.subr.bf16.mxu0 0
    %743 = vmatpush1.bf16.msra.mxu0 0
    %744 = vmatprep.subr.bf16.mxu0 0
    %745 = vmatpush1.bf16.msra.mxu0 0
    %746 = vmatprep.subr.bf16.mxu0 0
    %747 = vmatpush1.bf16.msra.mxu0 0
    %748 = vmatprep.subr.bf16.mxu0 0
    %749 = vmatpush1.bf16.msra.mxu0 0
    %750 = vmatprep.subr.bf16.mxu0 0
    %751 = vmatpush1.bf16.msra.mxu0 0
    %752 = vmatprep.subr.bf16.mxu0 0
    %753 = vmatpush1.bf16.msra.mxu0 0
    %754 = vmatprep.subr.bf16.mxu0 0
    %755 = vmatpush1.bf16.msra.mxu0 0
    %756 = vmatprep.mubr.bf16.mxu0 0
    %757 = vmatmul.mubr.bf16.gmra.mrb[0].mxu0 %v716
    %v758 = vpop.f32.mrb[0].mxu0
    %v759 = vadd.f32 0.0, %v758
    %v760 = vpop.f32.mrb[0].mxu0
    %v761 = vpop.f32.mrb[0].mxu0
    %v762 = vadd.f32 0.0, %v761
    %v763 = vpop.f32.mrb[0].mxu0
    %764 = vmatprep.mubr.bf16.mxu0 0
    %765 = vmatmul.mubr.bf16.gmra.mrb[0].mxu0 %v719
    %v766 = vpop.f32.mrb[0].mxu0
    %v767 = vadd.f32 0.0, %v766
    %v768 = vpop.f32.mrb[0].mxu0
    %v769 = vpop.f32.mrb[0].mxu0
    %v770 = vadd.f32 0.0, %v769
    %v771 = vpop.f32.mrb[0].mxu0
    %772 = vmatprep.mubr.bf16.mxu0 0
    %773 = vmatmul.mubr.bf16.gmra.mrb[0].mxu0 %v722
    %v774 = vpop.f32.mrb[0].mxu0
    %v775 = vadd.f32 0.0, %v774
    %v776 = vpop.f32.mrb[0].mxu0
    %v777 = vpop.f32.mrb[0].mxu0
    %v778 = vpop.f32.mrb[0].mxu0
    %779 = vdwg.mxu0
    %v785 = vunpack.c.l.b16 %v692
    %v786 = vunpack.c.l.b16 %v693
    %v787 = vunpack.c.l.b16 %v694
    %v788 = vunpack.c.l.b16 %v695
    %v789 = vunpack.c.l.b16 %v696
    %v790 = vpack.c.b16 %v786, %v785
    %v791 = vpack.c.b16 %v788, %v787
    %v792 = vpack.c.b16 %v789, %v789
    %v794 = vsel %vm68, %v790, 0
    %v797 = vsel %vm68, %v791, 0
    %v800 = vsel %vm68, %v792, 0
    %802 = vmatprep.subr.bf16.mxu0 0
    %803 = vmatpush1.bf16.msra.mxu0 %v161
    %804 = vmatprep.subr.bf16.mxu0 0
    %805 = vmatpush1.bf16.msra.mxu0 0
    %806 = vmatprep.subr.bf16.mxu0 0
    %807 = vmatpush1.bf16.msra.mxu0 0
    %808 = vmatprep.subr.bf16.mxu0 0
    %809 = vmatpush1.bf16.msra.mxu0 0
    %810 = vmatprep.subr.bf16.mxu0 0
    %811 = vmatpush1.bf16.msra.mxu0 0
    %812 = vmatprep.subr.bf16.mxu0 0
    %813 = vmatpush1.bf16.msra.mxu0 0
    %814 = vmatprep.subr.bf16.mxu0 0
    %815 = vmatpush1.bf16.msra.mxu0 0
    %816 = vmatprep.subr.bf16.mxu0 0
    %817 = vmatpush1.bf16.msra.mxu0 0
    %818 = vmatprep.subr.bf16.mxu0 0
    %819 = vmatpush1.bf16.msra.mxu0 0
    %820 = vmatprep.subr.bf16.mxu0 0
    %821 = vmatpush1.bf16.msra.mxu0 0
    %822 = vmatprep.subr.bf16.mxu0 0
    %823 = vmatpush1.bf16.msra.mxu0 0
    %824 = vmatprep.subr.bf16.mxu0 0
    %825 = vmatpush1.bf16.msra.mxu0 0
    %826 = vmatprep.subr.bf16.mxu0 0
    %827 = vmatpush1.bf16.msra.mxu0 0
    %828 = vmatprep.subr.bf16.mxu0 0
    %829 = vmatpush1.bf16.msra.mxu0 0
    %830 = vmatprep.subr.bf16.mxu0 0
    %831 = vmatpush1.bf16.msra.mxu0 0
    %832 = vmatprep.subr.bf16.mxu0 0
    %833 = vmatpush1.bf16.msra.mxu0 0
    %834 = vmatprep.mubr.bf16.mxu0 0
    %835 = vmatmul.mubr.bf16.gmra.mrb[0].mxu0 %v794
    %v836 = vpop.f32.mrb[0].mxu0
    %v837 = vadd.f32 %v759, %v836
    %v838 = vpop.f32.mrb[0].mxu0
    %v839 = vpop.f32.mrb[0].mxu0
    %v840 = vadd.f32 %v762, %v839
    %v841 = vpop.f32.mrb[0].mxu0
    %842 = vmatprep.mubr.bf16.mxu0 0
    %843 = vmatmul.mubr.bf16.gmra.mrb[0].mxu0 %v797
    %v844 = vpop.f32.mrb[0].mxu0
    %v845 = vadd.f32 %v767, %v844
    %v846 = vpop.f32.mrb[0].mxu0
    %v847 = vpop.f32.mrb[0].mxu0
    %v848 = vadd.f32 %v770, %v847
    %v849 = vpop.f32.mrb[0].mxu0
    %850 = vmatprep.mubr.bf16.mxu0 0
    %851 = vmatmul.mubr.bf16.gmra.mrb[0].mxu0 %v800
    %v852 = vpop.f32.mrb[0].mxu0
    %v853 = vadd.f32 %v775, %v852
    %v854 = vpop.f32.mrb[0].mxu0
    %v855 = vpop.f32.mrb[0].mxu0
    %v856 = vpop.f32.mrb[0].mxu0
    %857 = vdwg.mxu0
    %v858 = vadd.f32 %v837, %v223
    %v859 = vadd.f32 %v840, %v223
    %v860 = vadd.f32 %v845, %v223
    %v861 = vadd.f32 %v848, %v223
    %v862 = vadd.f32 %v853, %v223
    %v863 = vmax.f32 %v858, 0.0
    %v864 = vmax.f32 %v859, 0.0
    %v865 = vmax.f32 %v860, 0.0
    %v866 = vmax.f32 %v861, 0.0
    %v867 = vmax.f32 %v862, 0.0
    %v868 = vpack.c.bf16 %v864, %v863
    %v869 = vpack.c.bf16 %v866, %v865
    %v870 = vpack.c.bf16 %v867, %v867
    %v872 = vsel %vm277, %v868, 0
    %v875 = vsel %vm277, %v869, 0
    %v878 = vsel %vm277, %v870, 0
    %880 = vmatprep.subr.bf16.mxu0 0
    %881 = vmatpush1.bf16.msra.mxu0 %v269
    %882 = vmatprep.subr.bf16.mxu0 0
    %883 = vmatpush1.bf16.msra.mxu0 %v270
    %884 = vmatprep.subr.bf16.mxu0 0
    %885 = vmatpush1.bf16.msra.mxu0 %v271
    %886 = vmatprep.subr.bf16.mxu0 0
    %887 = vmatpush1.bf16.msra.mxu0 %v272
    %888 = vmatprep.subr.bf16.mxu0 0
    %889 = vmatpush1.bf16.msra.mxu0 0
    %890 = vmatprep.subr.bf16.mxu0 0
    %891 = vmatpush1.bf16.msra.mxu0 0
    %892 = vmatprep.subr.bf16.mxu0 0
    %893 = vmatpush1.bf16.msra.mxu0 0
    %894 = vmatprep.subr.bf16.mxu0 0
    %895 = vmatpush1.bf16.msra.mxu0 0
    %896 = vmatprep.subr.bf16.mxu0 0
    %897 = vmatpush1.bf16.msra.mxu0 0
    %898 = vmatprep.subr.bf16.mxu0 0
    %899 = vmatpush1.bf16.msra.mxu0 0
    %900 = vmatprep.subr.bf16.mxu0 0
    %901 = vmatpush1.bf16.msra.mxu0 0
    %902 = vmatprep.subr.bf16.mxu0 0
    %903 = vmatpush1.bf16.msra.mxu0 0
    %904 = vmatprep.subr.bf16.mxu0 0
    %905 = vmatpush1.bf16.msra.mxu0 0
    %906 = vmatprep.subr.bf16.mxu0 0
    %907 = vmatpush1.bf16.msra.mxu0 0
    %908 = vmatprep.subr.bf16.mxu0 0
    %909 = vmatpush1.bf16.msra.mxu0 0
    %910 = vmatprep.subr.bf16.mxu0 0
    %911 = vmatpush1.bf16.msra.mxu0 0
    %912 = vmatprep.mubr.bf16.mxu0 0
    %913 = vmatmul.mubr.bf16.gmra.mrb[0].mxu0 %v872
    %v914 = vpop.f32.mrb[0].mxu0
    %v915 = vadd.f32 %v251, %v914
    %v916 = vpop.f32.mrb[0].mxu0
    %v917 = vpop.f32.mrb[0].mxu0
    %v918 = vadd.f32 %v251, %v917
    %v919 = vpop.f32.mrb[0].mxu0
    %920 = vmatprep.mubr.bf16.mxu0 0
    %921 = vmatmul.mubr.bf16.gmra.mrb[0].mxu0 %v875
    %v922 = vpop.f32.mrb[0].mxu0
    %v923 = vadd.f32 %v251, %v922
    %v924 = vpop.f32.mrb[0].mxu0
    %v925 = vpop.f32.mrb[0].mxu0
    %v926 = vadd.f32 %v251, %v925
    %v927 = vpop.f32.mrb[0].mxu0
    %928 = vmatprep.mubr.bf16.mxu0 0
    %929 = vmatmul.mubr.bf16.gmra.mrb[0].mxu0 %v878
    %v930 = vpop.f32.mrb[0].mxu0
    %v931 = vadd.f32 %v251, %v930
    %v932 = vpop.f32.mrb[0].mxu0
    %v933 = vpop.f32.mrb[0].mxu0
    %v934 = vpop.f32.mrb[0].mxu0
    %935 = vdwg.mxu0
    %v936 = vmax.f32 %v915, 0.0
    %v937 = vmax.f32 %v918, 0.0
    %v938 = vmax.f32 %v923, 0.0
    %v939 = vmax.f32 %v926, 0.0
    %v940 = vmax.f32 %v931, 0.0
    %vm941 = vcmp.gt.s32.totalorder %v37, 2
    %vm942 = vcmp.gt.s32.totalorder %v38, 2
    %vm943 = vcmp.gt.s32.totalorder %v39, 2
    %vm944 = vcmp.gt.s32.totalorder %v40, 2
    %vm945 = vcmp.gt.s32.totalorder %v41, 2
    %v946 = vsel %vm941, 1, 0
    %v947 = vsel %vm942, 1, 0
    %v948 = vsel %vm943, 1, 0
    %v949 = vsel %vm944, 1, 0
    %v950 = vsel %vm945, 1, 0
    %v951 = vcvt.s32.f32 %v946
    %v952 = vcvt.s32.f32 %v947
    %v953 = vcvt.s32.f32 %v948
    %v954 = vcvt.s32.f32 %v949
    %v955 = vcvt.s32.f32 %v950
    %957 = vset.pattern.permute.xlu0 0
    %958 = vperm.xlu0 %957, %v951
    %v959 = vpop.permute.xlu0 %958
    %962 = vset.pattern.permute.xlu0 0
    %963 = vperm.xlu0 %962, %v952
    %v964 = vpop.permute.xlu0 %963
    %967 = vset.pattern.permute.xlu0 0
    %968 = vperm.xlu0 %967, %v953
    %v969 = vpop.permute.xlu0 %968
    %972 = vset.pattern.permute.xlu0 0
    %973 = vperm.xlu0 %972, %v954
    %v974 = vpop.permute.xlu0 %973
    %977 = vset.pattern.permute.xlu0 0
    %978 = vperm.xlu0 %977, %v955
    %v979 = vpop.permute.xlu0 %978
    %v981 = vmul.f32 %v936, %v959
    %v982 = vmul.f32 %v937, %v964
    %v983 = vmul.f32 %v938, %v969
    %v984 = vmul.f32 %v939, %v974
    %v985 = vmul.f32 %v940, %v979
    %v986 = vmax.f32 %v687, %v981
    %v987 = vmax.f32 %v688, %v982
    %v988 = vmax.f32 %v689, %v983
    %v989 = vmax.f32 %v690, %v984
    %v990 = vmax.f32 %v691, %v985
    %v991 = vld [vmem:[%s0 + $0x3c] sm:$0xf]
    %v992 = vld [vmem:[%s0 + $0x40] sm:$0xf]
    %v993 = vld [vmem:[%s0 + $0x44] sm:$0xf]
    %v994 = vld [vmem:[%s0 + $0x48] sm:$0xf]
    %v995 = vld [vmem:[%s0 + $0x4c] sm:$0xf]
    %v996 = vld [vmem:[%s1 + $0x3c] sm:$0xf]
    %v997 = vld [vmem:[%s1 + $0x40] sm:$0xf]
    %v998 = vld [vmem:[%s1 + $0x44] sm:$0xf]
    %v999 = vld [vmem:[%s1 + $0x48] sm:$0xf]
    %v1000 = vld [vmem:[%s1 + $0x4c] sm:$0xf]
    %v1006 = vunpack.c.l.b16 %v996
    %v1007 = vunpack.c.l.b16 %v997
    %v1008 = vunpack.c.l.b16 %v998
    %v1009 = vunpack.c.l.b16 %v999
    %v1010 = vunpack.c.l.b16 %v1000
    %v1011 = vpack.c.b16 %v1007, %v1006
    %v1012 = vpack.c.b16 %v1009, %v1008
    %v1013 = vpack.c.b16 %v1010, %v1010
    %v1015 = vsel %vm68, %v1011, 0
    %v1018 = vsel %vm68, %v1012, 0
    %v1021 = vsel %vm68, %v1013, 0
    %1023 = vmatprep.subr.bf16.mxu0 0
    %1024 = vmatpush1.bf16.msra.mxu0 %v80
    %1025 = vmatprep.subr.bf16.mxu0 0
    %1026 = vmatpush1.bf16.msra.mxu0 0
    %1027 = vmatprep.subr.bf16.mxu0 0
    %1028 = vmatpush1.bf16.msra.mxu0 0
    %1029 = vmatprep.subr.bf16.mxu0 0
    %1030 = vmatpush1.bf16.msra.mxu0 0
    %1031 = vmatprep.subr.bf16.mxu0 0
    %1032 = vmatpush1.bf16.msra.mxu0 0
    %1033 = vmatprep.subr.bf16.mxu0 0
    %1034 = vmatpush1.bf16.msra.mxu0 0
    %1035 = vmatprep.subr.bf16.mxu0 0
    %1036 = vmatpush1.bf16.msra.mxu0 0
    %1037 = vmatprep.subr.bf16.mxu0 0
    %1038 = vmatpush1.bf16.msra.mxu0 0
    %1039 = vmatprep.subr.bf16.mxu0 0
    %1040 = vmatpush1.bf16.msra.mxu0 0
    %1041 = vmatprep.subr.bf16.mxu0 0
    %1042 = vmatpush1.bf16.msra.mxu0 0
    %1043 = vmatprep.subr.bf16.mxu0 0
    %1044 = vmatpush1.bf16.msra.mxu0 0
    %1045 = vmatprep.subr.bf16.mxu0 0
    %1046 = vmatpush1.bf16.msra.mxu0 0
    %1047 = vmatprep.subr.bf16.mxu0 0
    %1048 = vmatpush1.bf16.msra.mxu0 0
    %1049 = vmatprep.subr.bf16.mxu0 0
    %1050 = vmatpush1.bf16.msra.mxu0 0
    %1051 = vmatprep.subr.bf16.mxu0 0
    %1052 = vmatpush1.bf16.msra.mxu0 0
    %1053 = vmatprep.subr.bf16.mxu0 0
    %1054 = vmatpush1.bf16.msra.mxu0 0
    %1055 = vmatprep.mubr.bf16.mxu0 0
    %1056 = vmatmul.mubr.bf16.gmra.mrb[0].mxu0 %v1015
    %v1057 = vpop.f32.mrb[0].mxu0
    %v1058 = vadd.f32 0.0, %v1057
    %v1059 = vpop.f32.mrb[0].mxu0
    %v1060 = vpop.f32.mrb[0].mxu0
    %v1061 = vadd.f32 0.0, %v1060
    %v1062 = vpop.f32.mrb[0].mxu0
    %1063 = vmatprep.mubr.bf16.mxu0 0
    %1064 = vmatmul.mubr.bf16.gmra.mrb[0].mxu0 %v1018
    %v1065 = vpop.f32.mrb[0].mxu0
    %v1066 = vadd.f32 0.0, %v1065
    %v1067 = vpop.f32.mrb[0].mxu0
    %v1068 = vpop.f32.mrb[0].mxu0
    %v1069 = vadd.f32 0.0, %v1068
    %v1070 = vpop.f32.mrb[0].mxu0
    %1071 = vmatprep.mubr.bf16.mxu0 0
    %1072 = vmatmul.mubr.bf16.gmra.mrb[0].mxu0 %v1021
    %v1073 = vpop.f32.mrb[0].mxu0
    %v1074 = vadd.f32 0.0, %v1073
    %v1075 = vpop.f32.mrb[0].mxu0
    %v1076 = vpop.f32.mrb[0].mxu0
    %v1077 = vpop.f32.mrb[0].mxu0
    %1078 = vdwg.mxu0
    %v1084 = vunpack.c.l.b16 %v991
    %v1085 = vunpack.c.l.b16 %v992
    %v1086 = vunpack.c.l.b16 %v993
    %v1087 = vunpack.c.l.b16 %v994
    %v1088 = vunpack.c.l.b16 %v995
    %v1089 = vpack.c.b16 %v1085, %v1084
    %v1090 = vpack.c.b16 %v1087, %v1086
    %v1091 = vpack.c.b16 %v1088, %v1088
    %v1093 = vsel %vm68, %v1089, 0
    %v1096 = vsel %vm68, %v1090, 0
    %v1099 = vsel %vm68, %v1091, 0
    %1101 = vmatprep.subr.bf16.mxu0 0
    %1102 = vmatpush1.bf16.msra.mxu0 %v161
    %1103 = vmatprep.subr.bf16.mxu0 0
    %1104 = vmatpush1.bf16.msra.mxu0 0
    %1105 = vmatprep.subr.bf16.mxu0 0
    %1106 = vmatpush1.bf16.msra.mxu0 0
    %1107 = vmatprep.subr.bf16.mxu0 0
    %1108 = vmatpush1.bf16.msra.mxu0 0
    %1109 = vmatprep.subr.bf16.mxu0 0
    %1110 = vmatpush1.bf16.msra.mxu0 0
    %1111 = vmatprep.subr.bf16.mxu0 0
    %1112 = vmatpush1.bf16.msra.mxu0 0
    %1113 = vmatprep.subr.bf16.mxu0 0
    %1114 = vmatpush1.bf16.msra.mxu0 0
    %1115 = vmatprep.subr.bf16.mxu0 0
    %1116 = vmatpush1.bf16.msra.mxu0 0
    %1117 = vmatprep.subr.bf16.mxu0 0
    %1118 = vmatpush1.bf16.msra.mxu0 0
    %1119 = vmatprep.subr.bf16.mxu0 0
    %1120 = vmatpush1.bf16.msra.mxu0 0
    %1121 = vmatprep.subr.bf16.mxu0 0
    %1122 = vmatpush1.bf16.msra.mxu0 0
    %1123 = vmatprep.subr.bf16.mxu0 0
    %1124 = vmatpush1.bf16.msra.mxu0 0
    %1125 = vmatprep.subr.bf16.mxu0 0
    %1126 = vmatpush1.bf16.msra.mxu0 0
    %1127 = vmatprep.subr.bf16.mxu0 0
    %1128 = vmatpush1.bf16.msra.mxu0 0
    %1129 = vmatprep.subr.bf16.mxu0 0
    %1130 = vmatpush1.bf16.msra.mxu0 0
    %1131 = vmatprep.subr.bf16.mxu0 0
    %1132 = vmatpush1.bf16.msra.mxu0 0
    %1133 = vmatprep.mubr.bf16.mxu0 0
    %1134 = vmatmul.mubr.bf16.gmra.mrb[0].mxu0 %v1093
    %v1135 = vpop.f32.mrb[0].mxu0
    %v1136 = vadd.f32 %v1058, %v1135
    %v1137 = vpop.f32.mrb[0].mxu0
    %v1138 = vpop.f32.mrb[0].mxu0
    %v1139 = vadd.f32 %v1061, %v1138
    %v1140 = vpop.f32.mrb[0].mxu0
    %1141 = vmatprep.mubr.bf16.mxu0 0
    %1142 = vmatmul.mubr.bf16.gmra.mrb[0].mxu0 %v1096
    %v1143 = vpop.f32.mrb[0].mxu0
    %v1144 = vadd.f32 %v1066, %v1143
    %v1145 = vpop.f32.mrb[0].mxu0
    %v1146 = vpop.f32.mrb[0].mxu0
    %v1147 = vadd.f32 %v1069, %v1146
    %v1148 = vpop.f32.mrb[0].mxu0
    %1149 = vmatprep.mubr.bf16.mxu0 0
    %1150 = vmatmul.mubr.bf16.gmra.mrb[0].mxu0 %v1099
    %v1151 = vpop.f32.mrb[0].mxu0
    %v1152 = vadd.f32 %v1074, %v1151
    %v1153 = vpop.f32.mrb[0].mxu0
    %v1154 = vpop.f32.mrb[0].mxu0
    %v1155 = vpop.f32.mrb[0].mxu0
    %1156 = vdwg.mxu0
    %v1157 = vadd.f32 %v1136, %v223
    %v1158 = vadd.f32 %v1139, %v223
    %v1159 = vadd.f32 %v1144, %v223
    %v1160 = vadd.f32 %v1147, %v223
    %v1161 = vadd.f32 %v1152, %v223
    %v1162 = vmax.f32 %v1157, 0.0
    %v1163 = vmax.f32 %v1158, 0.0
    %v1164 = vmax.f32 %v1159, 0.0
    %v1165 = vmax.f32 %v1160, 0.0
    %v1166 = vmax.f32 %v1161, 0.0
    %v1167 = vpack.c.bf16 %v1163, %v1162
    %v1168 = vpack.c.bf16 %v1165, %v1164
    %v1169 = vpack.c.bf16 %v1166, %v1166
    %v1171 = vsel %vm277, %v1167, 0
    %v1174 = vsel %vm277, %v1168, 0
    %v1177 = vsel %vm277, %v1169, 0
    %1179 = vmatprep.subr.bf16.mxu0 0
    %1180 = vmatpush1.bf16.msra.mxu0 %v269
    %1181 = vmatprep.subr.bf16.mxu0 0
    %1182 = vmatpush1.bf16.msra.mxu0 %v270
    %1183 = vmatprep.subr.bf16.mxu0 0
    %1184 = vmatpush1.bf16.msra.mxu0 %v271
    %1185 = vmatprep.subr.bf16.mxu0 0
    %1186 = vmatpush1.bf16.msra.mxu0 %v272
    %1187 = vmatprep.subr.bf16.mxu0 0
    %1188 = vmatpush1.bf16.msra.mxu0 0
    %1189 = vmatprep.subr.bf16.mxu0 0
    %1190 = vmatpush1.bf16.msra.mxu0 0
    %1191 = vmatprep.subr.bf16.mxu0 0
    %1192 = vmatpush1.bf16.msra.mxu0 0
    %1193 = vmatprep.subr.bf16.mxu0 0
    %1194 = vmatpush1.bf16.msra.mxu0 0
    %1195 = vmatprep.subr.bf16.mxu0 0
    %1196 = vmatpush1.bf16.msra.mxu0 0
    %1197 = vmatprep.subr.bf16.mxu0 0
    %1198 = vmatpush1.bf16.msra.mxu0 0
    %1199 = vmatprep.subr.bf16.mxu0 0
    %1200 = vmatpush1.bf16.msra.mxu0 0
    %1201 = vmatprep.subr.bf16.mxu0 0
    %1202 = vmatpush1.bf16.msra.mxu0 0
    %1203 = vmatprep.subr.bf16.mxu0 0
    %1204 = vmatpush1.bf16.msra.mxu0 0
    %1205 = vmatprep.subr.bf16.mxu0 0
    %1206 = vmatpush1.bf16.msra.mxu0 0
    %1207 = vmatprep.subr.bf16.mxu0 0
    %1208 = vmatpush1.bf16.msra.mxu0 0
    %1209 = vmatprep.subr.bf16.mxu0 0
    %1210 = vmatpush1.bf16.msra.mxu0 0
    %1211 = vmatprep.mubr.bf16.mxu0 0
    %1212 = vmatmul.mubr.bf16.gmra.mrb[0].mxu0 %v1171
    %v1213 = vpop.f32.mrb[0].mxu0
    %v1214 = vadd.f32 %v251, %v1213
    %v1215 = vpop.f32.mrb[0].mxu0
    %v1216 = vpop.f32.mrb[0].mxu0
    %v1217 = vadd.f32 %v251, %v1216
    %v1218 = vpop.f32.mrb[0].mxu0
    %1219 = vmatprep.mubr.bf16.mxu0 0
    %1220 = vmatmul.mubr.bf16.gmra.mrb[0].mxu0 %v1174
    %v1221 = vpop.f32.mrb[0].mxu0
    %v1222 = vadd.f32 %v251, %v1221
    %v1223 = vpop.f32.mrb[0].mxu0
    %v1224 = vpop.f32.mrb[0].mxu0
    %v1225 = vadd.f32 %v251, %v1224
    %v1226 = vpop.f32.mrb[0].mxu0
    %1227 = vmatprep.mubr.bf16.mxu0 0
    %1228 = vmatmul.mubr.bf16.gmra.mrb[0].mxu0 %v1177
    %v1229 = vpop.f32.mrb[0].mxu0
    %v1230 = vadd.f32 %v251, %v1229
    %v1231 = vpop.f32.mrb[0].mxu0
    %v1232 = vpop.f32.mrb[0].mxu0
    %v1233 = vpop.f32.mrb[0].mxu0
    %1234 = vdwg.mxu0
    %v1235 = vmax.f32 %v1214, 0.0
    %v1236 = vmax.f32 %v1217, 0.0
    %v1237 = vmax.f32 %v1222, 0.0
    %v1238 = vmax.f32 %v1225, 0.0
    %v1239 = vmax.f32 %v1230, 0.0
    %vm1240 = vcmp.gt.s32.totalorder %v37, 3
    %vm1241 = vcmp.gt.s32.totalorder %v38, 3
    %vm1242 = vcmp.gt.s32.totalorder %v39, 3
    %vm1243 = vcmp.gt.s32.totalorder %v40, 3
    %vm1244 = vcmp.gt.s32.totalorder %v41, 3
    %v1245 = vsel %vm1240, 1, 0
    %v1246 = vsel %vm1241, 1, 0
    %v1247 = vsel %vm1242, 1, 0
    %v1248 = vsel %vm1243, 1, 0
    %v1249 = vsel %vm1244, 1, 0
    %v1250 = vcvt.s32.f32 %v1245
    %v1251 = vcvt.s32.f32 %v1246
    %v1252 = vcvt.s32.f32 %v1247
    %v1253 = vcvt.s32.f32 %v1248
    %v1254 = vcvt.s32.f32 %v1249
    %1256 = vset.pattern.permute.xlu0 0
    %1257 = vperm.xlu0 %1256, %v1250
    %v1258 = vpop.permute.xlu0 %1257
    %1261 = vset.pattern.permute.xlu0 0
    %1262 = vperm.xlu0 %1261, %v1251
    %v1263 = vpop.permute.xlu0 %1262
    %1266 = vset.pattern.permute.xlu0 0
    %1267 = vperm.xlu0 %1266, %v1252
    %v1268 = vpop.permute.xlu0 %1267
    %1271 = vset.pattern.permute.xlu0 0
    %1272 = vperm.xlu0 %1271, %v1253
    %v1273 = vpop.permute.xlu0 %1272
    %1276 = vset.pattern.permute.xlu0 0
    %1277 = vperm.xlu0 %1276, %v1254
    %v1278 = vpop.permute.xlu0 %1277
    %v1280 = vmul.f32 %v1235, %v1258
    %v1281 = vmul.f32 %v1236, %v1263
    %v1282 = vmul.f32 %v1237, %v1268
    %v1283 = vmul.f32 %v1238, %v1273
    %v1284 = vmul.f32 %v1239, %v1278
    %v1285 = vmax.f32 %v986, %v1280
    %v1286 = vmax.f32 %v987, %v1281
    %v1287 = vmax.f32 %v988, %v1282
    %v1288 = vmax.f32 %v989, %v1283
    %v1289 = vmax.f32 %v990, %v1284
    %v1290 = vld [vmem:[%s0 + $0x50] sm:$0xf]
    %v1291 = vld [vmem:[%s0 + $0x54] sm:$0xf]
    %v1292 = vld [vmem:[%s0 + $0x58] sm:$0xf]
    %v1293 = vld [vmem:[%s0 + $0x5c] sm:$0xf]
    %v1294 = vld [vmem:[%s0 + $0x60] sm:$0xf]
    %v1295 = vld [vmem:[%s1 + $0x50] sm:$0xf]
    %v1296 = vld [vmem:[%s1 + $0x54] sm:$0xf]
    %v1297 = vld [vmem:[%s1 + $0x58] sm:$0xf]
    %v1298 = vld [vmem:[%s1 + $0x5c] sm:$0xf]
    %v1299 = vld [vmem:[%s1 + $0x60] sm:$0xf]
    %v1305 = vunpack.c.l.b16 %v1295
    %v1306 = vunpack.c.l.b16 %v1296
    %v1307 = vunpack.c.l.b16 %v1297
    %v1308 = vunpack.c.l.b16 %v1298
    %v1309 = vunpack.c.l.b16 %v1299
    %v1310 = vpack.c.b16 %v1306, %v1305
    %v1311 = vpack.c.b16 %v1308, %v1307
    %v1312 = vpack.c.b16 %v1309, %v1309
    %v1314 = vsel %vm68, %v1310, 0
    %v1317 = vsel %vm68, %v1311, 0
    %v1320 = vsel %vm68, %v1312, 0
    %1322 = vmatprep.subr.bf16.mxu0 0
    %1323 = vmatpush1.bf16.msra.mxu0 %v80
    %1324 = vmatprep.subr.bf16.mxu0 0
    %1325 = vmatpush1.bf16.msra.mxu0 0
    %1326 = vmatprep.subr.bf16.mxu0 0
    %1327 = vmatpush1.bf16.msra.mxu0 0
    %1328 = vmatprep.subr.bf16.mxu0 0
    %1329 = vmatpush1.bf16.msra.mxu0 0
    %1330 = vmatprep.subr.bf16.mxu0 0
    %1331 = vmatpush1.bf16.msra.mxu0 0
    %1332 = vmatprep.subr.bf16.mxu0 0
    %1333 = vmatpush1.bf16.msra.mxu0 0
    %1334 = vmatprep.subr.bf16.mxu0 0
    %1335 = vmatpush1.bf16.msra.mxu0 0
    %1336 = vmatprep.subr.bf16.mxu0 0
    %1337 = vmatpush1.bf16.msra.mxu0 0
    %1338 = vmatprep.subr.bf16.mxu0 0
    %1339 = vmatpush1.bf16.msra.mxu0 0
    %1340 = vmatprep.subr.bf16.mxu0 0
    %1341 = vmatpush1.bf16.msra.mxu0 0
    %1342 = vmatprep.subr.bf16.mxu0 0
    %1343 = vmatpush1.bf16.msra.mxu0 0
    %1344 = vmatprep.subr.bf16.mxu0 0
    %1345 = vmatpush1.bf16.msra.mxu0 0
    %1346 = vmatprep.subr.bf16.mxu0 0
    %1347 = vmatpush1.bf16.msra.mxu0 0
    %1348 = vmatprep.subr.bf16.mxu0 0
    %1349 = vmatpush1.bf16.msra.mxu0 0
    %1350 = vmatprep.subr.bf16.mxu0 0
    %1351 = vmatpush1.bf16.msra.mxu0 0
    %1352 = vmatprep.subr.bf16.mxu0 0
    %1353 = vmatpush1.bf16.msra.mxu0 0
    %1354 = vmatprep.mubr.bf16.mxu0 0
    %1355 = vmatmul.mubr.bf16.gmra.mrb[0].mxu0 %v1314
    %v1356 = vpop.f32.mrb[0].mxu0
    %v1357 = vadd.f32 0.0, %v1356
    %v1358 = vpop.f32.mrb[0].mxu0
    %v1359 = vpop.f32.mrb[0].mxu0
    %v1360 = vadd.f32 0.0, %v1359
    %v1361 = vpop.f32.mrb[0].mxu0
    %1362 = vmatprep.mubr.bf16.mxu0 0
    %1363 = vmatmul.mubr.bf16.gmra.mrb[0].mxu0 %v1317
    %v1364 = vpop.f32.mrb[0].mxu0
    %v1365 = vadd.f32 0.0, %v1364
    %v1366 = vpop.f32.mrb[0].mxu0
    %v1367 = vpop.f32.mrb[0].mxu0
    %v1368 = vadd.f32 0.0, %v1367
    %v1369 = vpop.f32.mrb[0].mxu0
    %1370 = vmatprep.mubr.bf16.mxu0 0
    %1371 = vmatmul.mubr.bf16.gmra.mrb[0].mxu0 %v1320
    %v1372 = vpop.f32.mrb[0].mxu0
    %v1373 = vadd.f32 0.0, %v1372
    %v1374 = vpop.f32.mrb[0].mxu0
    %v1375 = vpop.f32.mrb[0].mxu0
    %v1376 = vpop.f32.mrb[0].mxu0
    %1377 = vdwg.mxu0
    %v1383 = vunpack.c.l.b16 %v1290
    %v1384 = vunpack.c.l.b16 %v1291
    %v1385 = vunpack.c.l.b16 %v1292
    %v1386 = vunpack.c.l.b16 %v1293
    %v1387 = vunpack.c.l.b16 %v1294
    %v1388 = vpack.c.b16 %v1384, %v1383
    %v1389 = vpack.c.b16 %v1386, %v1385
    %v1390 = vpack.c.b16 %v1387, %v1387
    %v1392 = vsel %vm68, %v1388, 0
    %v1395 = vsel %vm68, %v1389, 0
    %v1398 = vsel %vm68, %v1390, 0
    %1400 = vmatprep.subr.bf16.mxu0 0
    %1401 = vmatpush1.bf16.msra.mxu0 %v161
    %1402 = vmatprep.subr.bf16.mxu0 0
    %1403 = vmatpush1.bf16.msra.mxu0 0
    %1404 = vmatprep.subr.bf16.mxu0 0
    %1405 = vmatpush1.bf16.msra.mxu0 0
    %1406 = vmatprep.subr.bf16.mxu0 0
    %1407 = vmatpush1.bf16.msra.mxu0 0
    %1408 = vmatprep.subr.bf16.mxu0 0
    %1409 = vmatpush1.bf16.msra.mxu0 0
    %1410 = vmatprep.subr.bf16.mxu0 0
    %1411 = vmatpush1.bf16.msra.mxu0 0
    %1412 = vmatprep.subr.bf16.mxu0 0
    %1413 = vmatpush1.bf16.msra.mxu0 0
    %1414 = vmatprep.subr.bf16.mxu0 0
    %1415 = vmatpush1.bf16.msra.mxu0 0
    %1416 = vmatprep.subr.bf16.mxu0 0
    %1417 = vmatpush1.bf16.msra.mxu0 0
    %1418 = vmatprep.subr.bf16.mxu0 0
    %1419 = vmatpush1.bf16.msra.mxu0 0
    %1420 = vmatprep.subr.bf16.mxu0 0
    %1421 = vmatpush1.bf16.msra.mxu0 0
    %1422 = vmatprep.subr.bf16.mxu0 0
    %1423 = vmatpush1.bf16.msra.mxu0 0
    %1424 = vmatprep.subr.bf16.mxu0 0
    %1425 = vmatpush1.bf16.msra.mxu0 0
    %1426 = vmatprep.subr.bf16.mxu0 0
    %1427 = vmatpush1.bf16.msra.mxu0 0
    %1428 = vmatprep.subr.bf16.mxu0 0
    %1429 = vmatpush1.bf16.msra.mxu0 0
    %1430 = vmatprep.subr.bf16.mxu0 0
    %1431 = vmatpush1.bf16.msra.mxu0 0
    %1432 = vmatprep.mubr.bf16.mxu0 0
    %1433 = vmatmul.mubr.bf16.gmra.mrb[0].mxu0 %v1392
    %v1434 = vpop.f32.mrb[0].mxu0
    %v1435 = vadd.f32 %v1357, %v1434
    %v1436 = vpop.f32.mrb[0].mxu0
    %v1437 = vpop.f32.mrb[0].mxu0
    %v1438 = vadd.f32 %v1360, %v1437
    %v1439 = vpop.f32.mrb[0].mxu0
    %1440 = vmatprep.mubr.bf16.mxu0 0
    %1441 = vmatmul.mubr.bf16.gmra.mrb[0].mxu0 %v1395
    %v1442 = vpop.f32.mrb[0].mxu0
    %v1443 = vadd.f32 %v1365, %v1442
    %v1444 = vpop.f32.mrb[0].mxu0
    %v1445 = vpop.f32.mrb[0].mxu0
    %v1446 = vadd.f32 %v1368, %v1445
    %v1447 = vpop.f32.mrb[0].mxu0
    %1448 = vmatprep.mubr.bf16.mxu0 0
    %1449 = vmatmul.mubr.bf16.gmra.mrb[0].mxu0 %v1398
    %v1450 = vpop.f32.mrb[0].mxu0
    %v1451 = vadd.f32 %v1373, %v1450
    %v1452 = vpop.f32.mrb[0].mxu0
    %v1453 = vpop.f32.mrb[0].mxu0
    %v1454 = vpop.f32.mrb[0].mxu0
    %1455 = vdwg.mxu0
    %v1456 = vadd.f32 %v1435, %v223
    %v1457 = vadd.f32 %v1438, %v223
    %v1458 = vadd.f32 %v1443, %v223
    %v1459 = vadd.f32 %v1446, %v223
    %v1460 = vadd.f32 %v1451, %v223
    %v1461 = vmax.f32 %v1456, 0.0
    %v1462 = vmax.f32 %v1457, 0.0
    %v1463 = vmax.f32 %v1458, 0.0
    %v1464 = vmax.f32 %v1459, 0.0
    %v1465 = vmax.f32 %v1460, 0.0
    %v1466 = vpack.c.bf16 %v1462, %v1461
    %v1467 = vpack.c.bf16 %v1464, %v1463
    %v1468 = vpack.c.bf16 %v1465, %v1465
    %v1470 = vsel %vm277, %v1466, 0
    %v1473 = vsel %vm277, %v1467, 0
    %v1476 = vsel %vm277, %v1468, 0
    %1478 = vmatprep.subr.bf16.mxu0 0
    %1479 = vmatpush1.bf16.msra.mxu0 %v269
    %1480 = vmatprep.subr.bf16.mxu0 0
    %1481 = vmatpush1.bf16.msra.mxu0 %v270
    %1482 = vmatprep.subr.bf16.mxu0 0
    %1483 = vmatpush1.bf16.msra.mxu0 %v271
    %1484 = vmatprep.subr.bf16.mxu0 0
    %1485 = vmatpush1.bf16.msra.mxu0 %v272
    %1486 = vmatprep.subr.bf16.mxu0 0
    %1487 = vmatpush1.bf16.msra.mxu0 0
    %1488 = vmatprep.subr.bf16.mxu0 0
    %1489 = vmatpush1.bf16.msra.mxu0 0
    %1490 = vmatprep.subr.bf16.mxu0 0
    %1491 = vmatpush1.bf16.msra.mxu0 0
    %1492 = vmatprep.subr.bf16.mxu0 0
    %1493 = vmatpush1.bf16.msra.mxu0 0
    %1494 = vmatprep.subr.bf16.mxu0 0
    %1495 = vmatpush1.bf16.msra.mxu0 0
    %1496 = vmatprep.subr.bf16.mxu0 0
    %1497 = vmatpush1.bf16.msra.mxu0 0
    %1498 = vmatprep.subr.bf16.mxu0 0
    %1499 = vmatpush1.bf16.msra.mxu0 0
    %1500 = vmatprep.subr.bf16.mxu0 0
    %1501 = vmatpush1.bf16.msra.mxu0 0
    %1502 = vmatprep.subr.bf16.mxu0 0
    %1503 = vmatpush1.bf16.msra.mxu0 0
    %1504 = vmatprep.subr.bf16.mxu0 0
    %1505 = vmatpush1.bf16.msra.mxu0 0
    %1506 = vmatprep.subr.bf16.mxu0 0
    %1507 = vmatpush1.bf16.msra.mxu0 0
    %1508 = vmatprep.subr.bf16.mxu0 0
    %1509 = vmatpush1.bf16.msra.mxu0 0
    %1510 = vmatprep.mubr.bf16.mxu0 0
    %1511 = vmatmul.mubr.bf16.gmra.mrb[0].mxu0 %v1470
    %v1512 = vpop.f32.mrb[0].mxu0
    %v1513 = vadd.f32 %v251, %v1512
    %v1514 = vpop.f32.mrb[0].mxu0
    %v1515 = vpop.f32.mrb[0].mxu0
    %v1516 = vadd.f32 %v251, %v1515
    %v1517 = vpop.f32.mrb[0].mxu0
    %1518 = vmatprep.mubr.bf16.mxu0 0
    %1519 = vmatmul.mubr.bf16.gmra.mrb[0].mxu0 %v1473
    %v1520 = vpop.f32.mrb[0].mxu0
    %v1521 = vadd.f32 %v251, %v1520
    %v1522 = vpop.f32.mrb[0].mxu0
    %v1523 = vpop.f32.mrb[0].mxu0
    %v1524 = vadd.f32 %v251, %v1523
    %v1525 = vpop.f32.mrb[0].mxu0
    %1526 = vmatprep.mubr.bf16.mxu0 0
    %1527 = vmatmul.mubr.bf16.gmra.mrb[0].mxu0 %v1476
    %v1528 = vpop.f32.mrb[0].mxu0
    %v1529 = vadd.f32 %v251, %v1528
    %v1530 = vpop.f32.mrb[0].mxu0
    %v1531 = vpop.f32.mrb[0].mxu0
    %v1532 = vpop.f32.mrb[0].mxu0
    %1533 = vdwg.mxu0
    %v1534 = vmax.f32 %v1513, 0.0
    %v1535 = vmax.f32 %v1516, 0.0
    %v1536 = vmax.f32 %v1521, 0.0
    %v1537 = vmax.f32 %v1524, 0.0
    %v1538 = vmax.f32 %v1529, 0.0
    %vm1539 = vcmp.gt.s32.totalorder %v37, 4
    %vm1540 = vcmp.gt.s32.totalorder %v38, 4
    %vm1541 = vcmp.gt.s32.totalorder %v39, 4
    %vm1542 = vcmp.gt.s32.totalorder %v40, 4
    %vm1543 = vcmp.gt.s32.totalorder %v41, 4
    %v1544 = vsel %vm1539, 1, 0
    %v1545 = vsel %vm1540, 1, 0
    %v1546 = vsel %vm1541, 1, 0
    %v1547 = vsel %vm1542, 1, 0
    %v1548 = vsel %vm1543, 1, 0
    %v1549 = vcvt.s32.f32 %v1544
    %v1550 = vcvt.s32.f32 %v1545
    %v1551 = vcvt.s32.f32 %v1546
    %v1552 = vcvt.s32.f32 %v1547
    %v1553 = vcvt.s32.f32 %v1548
    %1555 = vset.pattern.permute.xlu0 0
    %1556 = vperm.xlu0 %1555, %v1549
    %v1557 = vpop.permute.xlu0 %1556
    %1560 = vset.pattern.permute.xlu0 0
    %1561 = vperm.xlu0 %1560, %v1550
    %v1562 = vpop.permute.xlu0 %1561
    %1565 = vset.pattern.permute.xlu0 0
    %1566 = vperm.xlu0 %1565, %v1551
    %v1567 = vpop.permute.xlu0 %1566
    %1570 = vset.pattern.permute.xlu0 0
    %1571 = vperm.xlu0 %1570, %v1552
    %v1572 = vpop.permute.xlu0 %1571
    %1575 = vset.pattern.permute.xlu0 0
    %1576 = vperm.xlu0 %1575, %v1553
    %v1577 = vpop.permute.xlu0 %1576
    %v1579 = vmul.f32 %v1534, %v1557
    %v1580 = vmul.f32 %v1535, %v1562
    %v1581 = vmul.f32 %v1536, %v1567
    %v1582 = vmul.f32 %v1537, %v1572
    %v1583 = vmul.f32 %v1538, %v1577
    %v1584 = vmax.f32 %v1285, %v1579
    %v1585 = vmax.f32 %v1286, %v1580
    %v1586 = vmax.f32 %v1287, %v1581
    %v1587 = vmax.f32 %v1288, %v1582
    %v1588 = vmax.f32 %v1289, %v1583
    %v1589 = vld [vmem:[%s0 + $0x64] sm:$0xf]
    %v1590 = vld [vmem:[%s0 + $0x68] sm:$0xf]
    %v1591 = vld [vmem:[%s0 + $0x6c] sm:$0xf]
    %v1592 = vld [vmem:[%s0 + $0x70] sm:$0xf]
    %v1593 = vld [vmem:[%s0 + $0x74] sm:$0xf]
    %v1594 = vld [vmem:[%s1 + $0x64] sm:$0xf]
    %v1595 = vld [vmem:[%s1 + $0x68] sm:$0xf]
    %v1596 = vld [vmem:[%s1 + $0x6c] sm:$0xf]
    %v1597 = vld [vmem:[%s1 + $0x70] sm:$0xf]
    %v1598 = vld [vmem:[%s1 + $0x74] sm:$0xf]
    %v1604 = vunpack.c.l.b16 %v1594
    %v1605 = vunpack.c.l.b16 %v1595
    %v1606 = vunpack.c.l.b16 %v1596
    %v1607 = vunpack.c.l.b16 %v1597
    %v1608 = vunpack.c.l.b16 %v1598
    %v1609 = vpack.c.b16 %v1605, %v1604
    %v1610 = vpack.c.b16 %v1607, %v1606
    %v1611 = vpack.c.b16 %v1608, %v1608
    %v1613 = vsel %vm68, %v1609, 0
    %v1616 = vsel %vm68, %v1610, 0
    %v1619 = vsel %vm68, %v1611, 0
    %1621 = vmatprep.subr.bf16.mxu0 0
    %1622 = vmatpush1.bf16.msra.mxu0 %v80
    %1623 = vmatprep.subr.bf16.mxu0 0
    %1624 = vmatpush1.bf16.msra.mxu0 0
    %1625 = vmatprep.subr.bf16.mxu0 0
    %1626 = vmatpush1.bf16.msra.mxu0 0
    %1627 = vmatprep.subr.bf16.mxu0 0
    %1628 = vmatpush1.bf16.msra.mxu0 0
    %1629 = vmatprep.subr.bf16.mxu0 0
    %1630 = vmatpush1.bf16.msra.mxu0 0
    %1631 = vmatprep.subr.bf16.mxu0 0
    %1632 = vmatpush1.bf16.msra.mxu0 0
    %1633 = vmatprep.subr.bf16.mxu0 0
    %1634 = vmatpush1.bf16.msra.mxu0 0
    %1635 = vmatprep.subr.bf16.mxu0 0
    %1636 = vmatpush1.bf16.msra.mxu0 0
    %1637 = vmatprep.subr.bf16.mxu0 0
    %1638 = vmatpush1.bf16.msra.mxu0 0
    %1639 = vmatprep.subr.bf16.mxu0 0
    %1640 = vmatpush1.bf16.msra.mxu0 0
    %1641 = vmatprep.subr.bf16.mxu0 0
    %1642 = vmatpush1.bf16.msra.mxu0 0
    %1643 = vmatprep.subr.bf16.mxu0 0
    %1644 = vmatpush1.bf16.msra.mxu0 0
    %1645 = vmatprep.subr.bf16.mxu0 0
    %1646 = vmatpush1.bf16.msra.mxu0 0
    %1647 = vmatprep.subr.bf16.mxu0 0
    %1648 = vmatpush1.bf16.msra.mxu0 0
    %1649 = vmatprep.subr.bf16.mxu0 0
    %1650 = vmatpush1.bf16.msra.mxu0 0
    %1651 = vmatprep.subr.bf16.mxu0 0
    %1652 = vmatpush1.bf16.msra.mxu0 0
    %1653 = vmatprep.mubr.bf16.mxu0 0
    %1654 = vmatmul.mubr.bf16.gmra.mrb[0].mxu0 %v1613
    %v1655 = vpop.f32.mrb[0].mxu0
    %v1656 = vadd.f32 0.0, %v1655
    %v1657 = vpop.f32.mrb[0].mxu0
    %v1658 = vpop.f32.mrb[0].mxu0
    %v1659 = vadd.f32 0.0, %v1658
    %v1660 = vpop.f32.mrb[0].mxu0
    %1661 = vmatprep.mubr.bf16.mxu0 0
    %1662 = vmatmul.mubr.bf16.gmra.mrb[0].mxu0 %v1616
    %v1663 = vpop.f32.mrb[0].mxu0
    %v1664 = vadd.f32 0.0, %v1663
    %v1665 = vpop.f32.mrb[0].mxu0
    %v1666 = vpop.f32.mrb[0].mxu0
    %v1667 = vadd.f32 0.0, %v1666
    %v1668 = vpop.f32.mrb[0].mxu0
    %1669 = vmatprep.mubr.bf16.mxu0 0
    %1670 = vmatmul.mubr.bf16.gmra.mrb[0].mxu0 %v1619
    %v1671 = vpop.f32.mrb[0].mxu0
    %v1672 = vadd.f32 0.0, %v1671
    %v1673 = vpop.f32.mrb[0].mxu0
    %v1674 = vpop.f32.mrb[0].mxu0
    %v1675 = vpop.f32.mrb[0].mxu0
    %1676 = vdwg.mxu0
    %v1682 = vunpack.c.l.b16 %v1589
    %v1683 = vunpack.c.l.b16 %v1590
    %v1684 = vunpack.c.l.b16 %v1591
    %v1685 = vunpack.c.l.b16 %v1592
    %v1686 = vunpack.c.l.b16 %v1593
    %v1687 = vpack.c.b16 %v1683, %v1682
    %v1688 = vpack.c.b16 %v1685, %v1684
    %v1689 = vpack.c.b16 %v1686, %v1686
    %v1691 = vsel %vm68, %v1687, 0
    %v1694 = vsel %vm68, %v1688, 0
    %v1697 = vsel %vm68, %v1689, 0
    %1699 = vmatprep.subr.bf16.mxu0 0
    %1700 = vmatpush1.bf16.msra.mxu0 %v161
    %1701 = vmatprep.subr.bf16.mxu0 0
    %1702 = vmatpush1.bf16.msra.mxu0 0
    %1703 = vmatprep.subr.bf16.mxu0 0
    %1704 = vmatpush1.bf16.msra.mxu0 0
    %1705 = vmatprep.subr.bf16.mxu0 0
    %1706 = vmatpush1.bf16.msra.mxu0 0
    %1707 = vmatprep.subr.bf16.mxu0 0
    %1708 = vmatpush1.bf16.msra.mxu0 0
    %1709 = vmatprep.subr.bf16.mxu0 0
    %1710 = vmatpush1.bf16.msra.mxu0 0
    %1711 = vmatprep.subr.bf16.mxu0 0
    %1712 = vmatpush1.bf16.msra.mxu0 0
    %1713 = vmatprep.subr.bf16.mxu0 0
    %1714 = vmatpush1.bf16.msra.mxu0 0
    %1715 = vmatprep.subr.bf16.mxu0 0
    %1716 = vmatpush1.bf16.msra.mxu0 0
    %1717 = vmatprep.subr.bf16.mxu0 0
    %1718 = vmatpush1.bf16.msra.mxu0 0
    %1719 = vmatprep.subr.bf16.mxu0 0
    %1720 = vmatpush1.bf16.msra.mxu0 0
    %1721 = vmatprep.subr.bf16.mxu0 0
    %1722 = vmatpush1.bf16.msra.mxu0 0
    %1723 = vmatprep.subr.bf16.mxu0 0
    %1724 = vmatpush1.bf16.msra.mxu0 0
    %1725 = vmatprep.subr.bf16.mxu0 0
    %1726 = vmatpush1.bf16.msra.mxu0 0
    %1727 = vmatprep.subr.bf16.mxu0 0
    %1728 = vmatpush1.bf16.msra.mxu0 0
    %1729 = vmatprep.subr.bf16.mxu0 0
    %1730 = vmatpush1.bf16.msra.mxu0 0
    %1731 = vmatprep.mubr.bf16.mxu0 0
    %1732 = vmatmul.mubr.bf16.gmra.mrb[0].mxu0 %v1691
    %v1733 = vpop.f32.mrb[0].mxu0
    %v1734 = vadd.f32 %v1656, %v1733
    %v1735 = vpop.f32.mrb[0].mxu0
    %v1736 = vpop.f32.mrb[0].mxu0
    %v1737 = vadd.f32 %v1659, %v1736
    %v1738 = vpop.f32.mrb[0].mxu0
    %1739 = vmatprep.mubr.bf16.mxu0 0
    %1740 = vmatmul.mubr.bf16.gmra.mrb[0].mxu0 %v1694
    %v1741 = vpop.f32.mrb[0].mxu0
    %v1742 = vadd.f32 %v1664, %v1741
    %v1743 = vpop.f32.mrb[0].mxu0
    %v1744 = vpop.f32.mrb[0].mxu0
    %v1745 = vadd.f32 %v1667, %v1744
    %v1746 = vpop.f32.mrb[0].mxu0
    %1747 = vmatprep.mubr.bf16.mxu0 0
    %1748 = vmatmul.mubr.bf16.gmra.mrb[0].mxu0 %v1697
    %v1749 = vpop.f32.mrb[0].mxu0
    %v1750 = vadd.f32 %v1672, %v1749
    %v1751 = vpop.f32.mrb[0].mxu0
    %v1752 = vpop.f32.mrb[0].mxu0
    %v1753 = vpop.f32.mrb[0].mxu0
    %1754 = vdwg.mxu0
    %v1755 = vadd.f32 %v1734, %v223
    %v1756 = vadd.f32 %v1737, %v223
    %v1757 = vadd.f32 %v1742, %v223
    %v1758 = vadd.f32 %v1745, %v223
    %v1759 = vadd.f32 %v1750, %v223
    %v1760 = vmax.f32 %v1755, 0.0
    %v1761 = vmax.f32 %v1756, 0.0
    %v1762 = vmax.f32 %v1757, 0.0
    %v1763 = vmax.f32 %v1758, 0.0
    %v1764 = vmax.f32 %v1759, 0.0
    %v1765 = vpack.c.bf16 %v1761, %v1760
    %v1766 = vpack.c.bf16 %v1763, %v1762
    %v1767 = vpack.c.bf16 %v1764, %v1764
    %v1769 = vsel %vm277, %v1765, 0
    %v1772 = vsel %vm277, %v1766, 0
    %v1775 = vsel %vm277, %v1767, 0
    %1777 = vmatprep.subr.bf16.mxu0 0
    %1778 = vmatpush1.bf16.msra.mxu0 %v269
    %1779 = vmatprep.subr.bf16.mxu0 0
    %1780 = vmatpush1.bf16.msra.mxu0 %v270
    %1781 = vmatprep.subr.bf16.mxu0 0
    %1782 = vmatpush1.bf16.msra.mxu0 %v271
    %1783 = vmatprep.subr.bf16.mxu0 0
    %1784 = vmatpush1.bf16.msra.mxu0 %v272
    %1785 = vmatprep.subr.bf16.mxu0 0
    %1786 = vmatpush1.bf16.msra.mxu0 0
    %1787 = vmatprep.subr.bf16.mxu0 0
    %1788 = vmatpush1.bf16.msra.mxu0 0
    %1789 = vmatprep.subr.bf16.mxu0 0
    %1790 = vmatpush1.bf16.msra.mxu0 0
    %1791 = vmatprep.subr.bf16.mxu0 0
    %1792 = vmatpush1.bf16.msra.mxu0 0
    %1793 = vmatprep.subr.bf16.mxu0 0
    %1794 = vmatpush1.bf16.msra.mxu0 0
    %1795 = vmatprep.subr.bf16.mxu0 0
    %1796 = vmatpush1.bf16.msra.mxu0 0
    %1797 = vmatprep.subr.bf16.mxu0 0
    %1798 = vmatpush1.bf16.msra.mxu0 0
    %1799 = vmatprep.subr.bf16.mxu0 0
    %1800 = vmatpush1.bf16.msra.mxu0 0
    %1801 = vmatprep.subr.bf16.mxu0 0
    %1802 = vmatpush1.bf16.msra.mxu0 0
    %1803 = vmatprep.subr.bf16.mxu0 0
    %1804 = vmatpush1.bf16.msra.mxu0 0
    %1805 = vmatprep.subr.bf16.mxu0 0
    %1806 = vmatpush1.bf16.msra.mxu0 0
    %1807 = vmatprep.subr.bf16.mxu0 0
    %1808 = vmatpush1.bf16.msra.mxu0 0
    %1809 = vmatprep.mubr.bf16.mxu0 0
    %1810 = vmatmul.mubr.bf16.gmra.mrb[0].mxu0 %v1769
    %v1811 = vpop.f32.mrb[0].mxu0
    %v1812 = vadd.f32 %v251, %v1811
    %v1813 = vpop.f32.mrb[0].mxu0
    %v1814 = vpop.f32.mrb[0].mxu0
    %v1815 = vadd.f32 %v251, %v1814
    %v1816 = vpop.f32.mrb[0].mxu0
    %1817 = vmatprep.mubr.bf16.mxu0 0
    %1818 = vmatmul.mubr.bf16.gmra.mrb[0].mxu0 %v1772
    %v1819 = vpop.f32.mrb[0].mxu0
    %v1820 = vadd.f32 %v251, %v1819
    %v1821 = vpop.f32.mrb[0].mxu0
    %v1822 = vpop.f32.mrb[0].mxu0
    %v1823 = vadd.f32 %v251, %v1822
    %v1824 = vpop.f32.mrb[0].mxu0
    %1825 = vmatprep.mubr.bf16.mxu0 0
    %1826 = vmatmul.mubr.bf16.gmra.mrb[0].mxu0 %v1775
    %v1827 = vpop.f32.mrb[0].mxu0
    %v1828 = vadd.f32 %v251, %v1827
    %v1829 = vpop.f32.mrb[0].mxu0
    %v1830 = vpop.f32.mrb[0].mxu0
    %v1831 = vpop.f32.mrb[0].mxu0
    %1832 = vdwg.mxu0
    %v1833 = vmax.f32 %v1812, 0.0
    %v1834 = vmax.f32 %v1815, 0.0
    %v1835 = vmax.f32 %v1820, 0.0
    %v1836 = vmax.f32 %v1823, 0.0
    %v1837 = vmax.f32 %v1828, 0.0
    %vm1838 = vcmp.gt.s32.totalorder %v37, 5
    %vm1839 = vcmp.gt.s32.totalorder %v38, 5
    %vm1840 = vcmp.gt.s32.totalorder %v39, 5
    %vm1841 = vcmp.gt.s32.totalorder %v40, 5
    %vm1842 = vcmp.gt.s32.totalorder %v41, 5
    %v1843 = vsel %vm1838, 1, 0
    %v1844 = vsel %vm1839, 1, 0
    %v1845 = vsel %vm1840, 1, 0
    %v1846 = vsel %vm1841, 1, 0
    %v1847 = vsel %vm1842, 1, 0
    %v1848 = vcvt.s32.f32 %v1843
    %v1849 = vcvt.s32.f32 %v1844
    %v1850 = vcvt.s32.f32 %v1845
    %v1851 = vcvt.s32.f32 %v1846
    %v1852 = vcvt.s32.f32 %v1847
    %1854 = vset.pattern.permute.xlu0 0
    %1855 = vperm.xlu0 %1854, %v1848
    %v1856 = vpop.permute.xlu0 %1855
    %1859 = vset.pattern.permute.xlu0 0
    %1860 = vperm.xlu0 %1859, %v1849
    %v1861 = vpop.permute.xlu0 %1860
    %1864 = vset.pattern.permute.xlu0 0
    %1865 = vperm.xlu0 %1864, %v1850
    %v1866 = vpop.permute.xlu0 %1865
    %1869 = vset.pattern.permute.xlu0 0
    %1870 = vperm.xlu0 %1869, %v1851
    %v1871 = vpop.permute.xlu0 %1870
    %1874 = vset.pattern.permute.xlu0 0
    %1875 = vperm.xlu0 %1874, %v1852
    %v1876 = vpop.permute.xlu0 %1875
    %v1878 = vmul.f32 %v1833, %v1856
    %v1879 = vmul.f32 %v1834, %v1861
    %v1880 = vmul.f32 %v1835, %v1866
    %v1881 = vmul.f32 %v1836, %v1871
    %v1882 = vmul.f32 %v1837, %v1876
    %v1883 = vmax.f32 %v1584, %v1878
    %v1884 = vmax.f32 %v1585, %v1879
    %v1885 = vmax.f32 %v1586, %v1880
    %v1886 = vmax.f32 %v1587, %v1881
    %v1887 = vmax.f32 %v1588, %v1882
    %v1888 = vld [vmem:[%s0 + $0x78] sm:$0xf]
    %v1889 = vld [vmem:[%s0 + $0x7c] sm:$0xf]
    %v1890 = vld [vmem:[%s0 + $0x80] sm:$0xf]
    %v1891 = vld [vmem:[%s0 + $0x84] sm:$0xf]
    %v1892 = vld [vmem:[%s0 + $0x88] sm:$0xf]
    %v1893 = vld [vmem:[%s1 + $0x78] sm:$0xf]
    %v1894 = vld [vmem:[%s1 + $0x7c] sm:$0xf]
    %v1895 = vld [vmem:[%s1 + $0x80] sm:$0xf]
    %v1896 = vld [vmem:[%s1 + $0x84] sm:$0xf]
    %v1897 = vld [vmem:[%s1 + $0x88] sm:$0xf]
    %v1903 = vunpack.c.l.b16 %v1893
    %v1904 = vunpack.c.l.b16 %v1894
    %v1905 = vunpack.c.l.b16 %v1895
    %v1906 = vunpack.c.l.b16 %v1896
    %v1907 = vunpack.c.l.b16 %v1897
    %v1908 = vpack.c.b16 %v1904, %v1903
    %v1909 = vpack.c.b16 %v1906, %v1905
    %v1910 = vpack.c.b16 %v1907, %v1907
    %v1912 = vsel %vm68, %v1908, 0
    %v1915 = vsel %vm68, %v1909, 0
    %v1918 = vsel %vm68, %v1910, 0
    %1920 = vmatprep.subr.bf16.mxu0 0
    %1921 = vmatpush1.bf16.msra.mxu0 %v80
    %1922 = vmatprep.subr.bf16.mxu0 0
    %1923 = vmatpush1.bf16.msra.mxu0 0
    %1924 = vmatprep.subr.bf16.mxu0 0
    %1925 = vmatpush1.bf16.msra.mxu0 0
    %1926 = vmatprep.subr.bf16.mxu0 0
    %1927 = vmatpush1.bf16.msra.mxu0 0
    %1928 = vmatprep.subr.bf16.mxu0 0
    %1929 = vmatpush1.bf16.msra.mxu0 0
    %1930 = vmatprep.subr.bf16.mxu0 0
    %1931 = vmatpush1.bf16.msra.mxu0 0
    %1932 = vmatprep.subr.bf16.mxu0 0
    %1933 = vmatpush1.bf16.msra.mxu0 0
    %1934 = vmatprep.subr.bf16.mxu0 0
    %1935 = vmatpush1.bf16.msra.mxu0 0
    %1936 = vmatprep.subr.bf16.mxu0 0
    %1937 = vmatpush1.bf16.msra.mxu0 0
    %1938 = vmatprep.subr.bf16.mxu0 0
    %1939 = vmatpush1.bf16.msra.mxu0 0
    %1940 = vmatprep.subr.bf16.mxu0 0
    %1941 = vmatpush1.bf16.msra.mxu0 0
    %1942 = vmatprep.subr.bf16.mxu0 0
    %1943 = vmatpush1.bf16.msra.mxu0 0
    %1944 = vmatprep.subr.bf16.mxu0 0
    %1945 = vmatpush1.bf16.msra.mxu0 0
    %1946 = vmatprep.subr.bf16.mxu0 0
    %1947 = vmatpush1.bf16.msra.mxu0 0
    %1948 = vmatprep.subr.bf16.mxu0 0
    %1949 = vmatpush1.bf16.msra.mxu0 0
    %1950 = vmatprep.subr.bf16.mxu0 0
    %1951 = vmatpush1.bf16.msra.mxu0 0
    %1952 = vmatprep.mubr.bf16.mxu0 0
    %1953 = vmatmul.mubr.bf16.gmra.mrb[0].mxu0 %v1912
    %v1954 = vpop.f32.mrb[0].mxu0
    %v1955 = vadd.f32 0.0, %v1954
    %v1956 = vpop.f32.mrb[0].mxu0
    %v1957 = vpop.f32.mrb[0].mxu0
    %v1958 = vadd.f32 0.0, %v1957
    %v1959 = vpop.f32.mrb[0].mxu0
    %1960 = vmatprep.mubr.bf16.mxu0 0
    %1961 = vmatmul.mubr.bf16.gmra.mrb[0].mxu0 %v1915
    %v1962 = vpop.f32.mrb[0].mxu0
    %v1963 = vadd.f32 0.0, %v1962
    %v1964 = vpop.f32.mrb[0].mxu0
    %v1965 = vpop.f32.mrb[0].mxu0
    %v1966 = vadd.f32 0.0, %v1965
    %v1967 = vpop.f32.mrb[0].mxu0
    %1968 = vmatprep.mubr.bf16.mxu0 0
    %1969 = vmatmul.mubr.bf16.gmra.mrb[0].mxu0 %v1918
    %v1970 = vpop.f32.mrb[0].mxu0
    %v1971 = vadd.f32 0.0, %v1970
    %v1972 = vpop.f32.mrb[0].mxu0
    %v1973 = vpop.f32.mrb[0].mxu0
    %v1974 = vpop.f32.mrb[0].mxu0
    %1975 = vdwg.mxu0
    %v1981 = vunpack.c.l.b16 %v1888
    %v1982 = vunpack.c.l.b16 %v1889
    %v1983 = vunpack.c.l.b16 %v1890
    %v1984 = vunpack.c.l.b16 %v1891
    %v1985 = vunpack.c.l.b16 %v1892
    %v1986 = vpack.c.b16 %v1982, %v1981
    %v1987 = vpack.c.b16 %v1984, %v1983
    %v1988 = vpack.c.b16 %v1985, %v1985
    %v1990 = vsel %vm68, %v1986, 0
    %v1993 = vsel %vm68, %v1987, 0
    %v1996 = vsel %vm68, %v1988, 0
    %1998 = vmatprep.subr.bf16.mxu0 0
    %1999 = vmatpush1.bf16.msra.mxu0 %v161
    %2000 = vmatprep.subr.bf16.mxu0 0
    %2001 = vmatpush1.bf16.msra.mxu0 0
    %2002 = vmatprep.subr.bf16.mxu0 0
    %2003 = vmatpush1.bf16.msra.mxu0 0
    %2004 = vmatprep.subr.bf16.mxu0 0
    %2005 = vmatpush1.bf16.msra.mxu0 0
    %2006 = vmatprep.subr.bf16.mxu0 0
    %2007 = vmatpush1.bf16.msra.mxu0 0
    %2008 = vmatprep.subr.bf16.mxu0 0
    %2009 = vmatpush1.bf16.msra.mxu0 0
    %2010 = vmatprep.subr.bf16.mxu0 0
    %2011 = vmatpush1.bf16.msra.mxu0 0
    %2012 = vmatprep.subr.bf16.mxu0 0
    %2013 = vmatpush1.bf16.msra.mxu0 0
    %2014 = vmatprep.subr.bf16.mxu0 0
    %2015 = vmatpush1.bf16.msra.mxu0 0
    %2016 = vmatprep.subr.bf16.mxu0 0
    %2017 = vmatpush1.bf16.msra.mxu0 0
    %2018 = vmatprep.subr.bf16.mxu0 0
    %2019 = vmatpush1.bf16.msra.mxu0 0
    %2020 = vmatprep.subr.bf16.mxu0 0
    %2021 = vmatpush1.bf16.msra.mxu0 0
    %2022 = vmatprep.subr.bf16.mxu0 0
    %2023 = vmatpush1.bf16.msra.mxu0 0
    %2024 = vmatprep.subr.bf16.mxu0 0
    %2025 = vmatpush1.bf16.msra.mxu0 0
    %2026 = vmatprep.subr.bf16.mxu0 0
    %2027 = vmatpush1.bf16.msra.mxu0 0
    %2028 = vmatprep.subr.bf16.mxu0 0
    %2029 = vmatpush1.bf16.msra.mxu0 0
    %2030 = vmatprep.mubr.bf16.mxu0 0
    %2031 = vmatmul.mubr.bf16.gmra.mrb[0].mxu0 %v1990
    %v2032 = vpop.f32.mrb[0].mxu0
    %v2033 = vadd.f32 %v1955, %v2032
    %v2034 = vpop.f32.mrb[0].mxu0
    %v2035 = vpop.f32.mrb[0].mxu0
    %v2036 = vadd.f32 %v1958, %v2035
    %v2037 = vpop.f32.mrb[0].mxu0
    %2038 = vmatprep.mubr.bf16.mxu0 0
    %2039 = vmatmul.mubr.bf16.gmra.mrb[0].mxu0 %v1993
    %v2040 = vpop.f32.mrb[0].mxu0
    %v2041 = vadd.f32 %v1963, %v2040
    %v2042 = vpop.f32.mrb[0].mxu0
    %v2043 = vpop.f32.mrb[0].mxu0
    %v2044 = vadd.f32 %v1966, %v2043
    %v2045 = vpop.f32.mrb[0].mxu0
    %2046 = vmatprep.mubr.bf16.mxu0 0
    %2047 = vmatmul.mubr.bf16.gmra.mrb[0].mxu0 %v1996
    %v2048 = vpop.f32.mrb[0].mxu0
    %v2049 = vadd.f32 %v1971, %v2048
    %v2050 = vpop.f32.mrb[0].mxu0
    %v2051 = vpop.f32.mrb[0].mxu0
    %v2052 = vpop.f32.mrb[0].mxu0
    %2053 = vdwg.mxu0
    %v2054 = vadd.f32 %v2033, %v223
    %v2055 = vadd.f32 %v2036, %v223
    %v2056 = vadd.f32 %v2041, %v223
    %v2057 = vadd.f32 %v2044, %v223
    %v2058 = vadd.f32 %v2049, %v223
    %v2059 = vmax.f32 %v2054, 0.0
    %v2060 = vmax.f32 %v2055, 0.0
    %v2061 = vmax.f32 %v2056, 0.0
    %v2062 = vmax.f32 %v2057, 0.0
    %v2063 = vmax.f32 %v2058, 0.0
    %v2064 = vpack.c.bf16 %v2060, %v2059
    %v2065 = vpack.c.bf16 %v2062, %v2061
    %v2066 = vpack.c.bf16 %v2063, %v2063
    %v2068 = vsel %vm277, %v2064, 0
    %v2071 = vsel %vm277, %v2065, 0
    %v2074 = vsel %vm277, %v2066, 0
    %2076 = vmatprep.subr.bf16.mxu0 0
    %2077 = vmatpush1.bf16.msra.mxu0 %v269
    %2078 = vmatprep.subr.bf16.mxu0 0
    %2079 = vmatpush1.bf16.msra.mxu0 %v270
    %2080 = vmatprep.subr.bf16.mxu0 0
    %2081 = vmatpush1.bf16.msra.mxu0 %v271
    %2082 = vmatprep.subr.bf16.mxu0 0
    %2083 = vmatpush1.bf16.msra.mxu0 %v272
    %2084 = vmatprep.subr.bf16.mxu0 0
    %2085 = vmatpush1.bf16.msra.mxu0 0
    %2086 = vmatprep.subr.bf16.mxu0 0
    %2087 = vmatpush1.bf16.msra.mxu0 0
    %2088 = vmatprep.subr.bf16.mxu0 0
    %2089 = vmatpush1.bf16.msra.mxu0 0
    %2090 = vmatprep.subr.bf16.mxu0 0
    %2091 = vmatpush1.bf16.msra.mxu0 0
    %2092 = vmatprep.subr.bf16.mxu0 0
    %2093 = vmatpush1.bf16.msra.mxu0 0
    %2094 = vmatprep.subr.bf16.mxu0 0
    %2095 = vmatpush1.bf16.msra.mxu0 0
    %2096 = vmatprep.subr.bf16.mxu0 0
    %2097 = vmatpush1.bf16.msra.mxu0 0
    %2098 = vmatprep.subr.bf16.mxu0 0
    %2099 = vmatpush1.bf16.msra.mxu0 0
    %2100 = vmatprep.subr.bf16.mxu0 0
    %2101 = vmatpush1.bf16.msra.mxu0 0
    %2102 = vmatprep.subr.bf16.mxu0 0
    %2103 = vmatpush1.bf16.msra.mxu0 0
    %2104 = vmatprep.subr.bf16.mxu0 0
    %2105 = vmatpush1.bf16.msra.mxu0 0
    %2106 = vmatprep.subr.bf16.mxu0 0
    %2107 = vmatpush1.bf16.msra.mxu0 0
    %2108 = vmatprep.mubr.bf16.mxu0 0
    %2109 = vmatmul.mubr.bf16.gmra.mrb[0].mxu0 %v2068
    %v2110 = vpop.f32.mrb[0].mxu0
    %v2111 = vadd.f32 %v251, %v2110
    %v2112 = vpop.f32.mrb[0].mxu0
    %v2113 = vpop.f32.mrb[0].mxu0
    %v2114 = vadd.f32 %v251, %v2113
    %v2115 = vpop.f32.mrb[0].mxu0
    %2116 = vmatprep.mubr.bf16.mxu0 0
    %2117 = vmatmul.mubr.bf16.gmra.mrb[0].mxu0 %v2071
    %v2118 = vpop.f32.mrb[0].mxu0
    %v2119 = vadd.f32 %v251, %v2118
    %v2120 = vpop.f32.mrb[0].mxu0
    %v2121 = vpop.f32.mrb[0].mxu0
    %v2122 = vadd.f32 %v251, %v2121
    %v2123 = vpop.f32.mrb[0].mxu0
    %2124 = vmatprep.mubr.bf16.mxu0 0
    %2125 = vmatmul.mubr.bf16.gmra.mrb[0].mxu0 %v2074
    %v2126 = vpop.f32.mrb[0].mxu0
    %v2127 = vadd.f32 %v251, %v2126
    %v2128 = vpop.f32.mrb[0].mxu0
    %v2129 = vpop.f32.mrb[0].mxu0
    %v2130 = vpop.f32.mrb[0].mxu0
    %2131 = vdwg.mxu0
    %v2132 = vmax.f32 %v2111, 0.0
    %v2133 = vmax.f32 %v2114, 0.0
    %v2134 = vmax.f32 %v2119, 0.0
    %v2135 = vmax.f32 %v2122, 0.0
    %v2136 = vmax.f32 %v2127, 0.0
    %vm2137 = vcmp.gt.s32.totalorder %v37, 6
    %vm2138 = vcmp.gt.s32.totalorder %v38, 6
    %vm2139 = vcmp.gt.s32.totalorder %v39, 6
    %vm2140 = vcmp.gt.s32.totalorder %v40, 6
    %vm2141 = vcmp.gt.s32.totalorder %v41, 6
    %v2142 = vsel %vm2137, 1, 0
    %v2143 = vsel %vm2138, 1, 0
    %v2144 = vsel %vm2139, 1, 0
    %v2145 = vsel %vm2140, 1, 0
    %v2146 = vsel %vm2141, 1, 0
    %v2147 = vcvt.s32.f32 %v2142
    %v2148 = vcvt.s32.f32 %v2143
    %v2149 = vcvt.s32.f32 %v2144
    %v2150 = vcvt.s32.f32 %v2145
    %v2151 = vcvt.s32.f32 %v2146
    %2153 = vset.pattern.permute.xlu0 0
    %2154 = vperm.xlu0 %2153, %v2147
    %v2155 = vpop.permute.xlu0 %2154
    %2158 = vset.pattern.permute.xlu0 0
    %2159 = vperm.xlu0 %2158, %v2148
    %v2160 = vpop.permute.xlu0 %2159
    %2163 = vset.pattern.permute.xlu0 0
    %2164 = vperm.xlu0 %2163, %v2149
    %v2165 = vpop.permute.xlu0 %2164
    %2168 = vset.pattern.permute.xlu0 0
    %2169 = vperm.xlu0 %2168, %v2150
    %v2170 = vpop.permute.xlu0 %2169
    %2173 = vset.pattern.permute.xlu0 0
    %2174 = vperm.xlu0 %2173, %v2151
    %v2175 = vpop.permute.xlu0 %2174
    %v2177 = vmul.f32 %v2132, %v2155
    %v2178 = vmul.f32 %v2133, %v2160
    %v2179 = vmul.f32 %v2134, %v2165
    %v2180 = vmul.f32 %v2135, %v2170
    %v2181 = vmul.f32 %v2136, %v2175
    %v2182 = vmax.f32 %v1883, %v2177
    %v2183 = vmax.f32 %v1884, %v2178
    %v2184 = vmax.f32 %v1885, %v2179
    %v2185 = vmax.f32 %v1886, %v2180
    %v2186 = vmax.f32 %v1887, %v2181
    %v2187 = vld [vmem:[%s0 + $0x8c] sm:$0xf]
    %v2188 = vld [vmem:[%s0 + $0x90] sm:$0xf]
    %v2189 = vld [vmem:[%s0 + $0x94] sm:$0xf]
    %v2190 = vld [vmem:[%s0 + $0x98] sm:$0xf]
    %v2191 = vld [vmem:[%s0 + $0x9c] sm:$0xf]
    %v2192 = vld [vmem:[%s1 + $0x8c] sm:$0xf]
    %v2193 = vld [vmem:[%s1 + $0x90] sm:$0xf]
    %v2194 = vld [vmem:[%s1 + $0x94] sm:$0xf]
    %v2195 = vld [vmem:[%s1 + $0x98] sm:$0xf]
    %v2196 = vld [vmem:[%s1 + $0x9c] sm:$0xf]
    %v2202 = vunpack.c.l.b16 %v2192
    %v2203 = vunpack.c.l.b16 %v2193
    %v2204 = vunpack.c.l.b16 %v2194
    %v2205 = vunpack.c.l.b16 %v2195
    %v2206 = vunpack.c.l.b16 %v2196
    %v2207 = vpack.c.b16 %v2203, %v2202
    %v2208 = vpack.c.b16 %v2205, %v2204
    %v2209 = vpack.c.b16 %v2206, %v2206
    %v2211 = vsel %vm68, %v2207, 0
    %v2214 = vsel %vm68, %v2208, 0
    %v2217 = vsel %vm68, %v2209, 0
    %2219 = vmatprep.subr.bf16.mxu0 0
    %2220 = vmatpush1.bf16.msra.mxu0 %v80
    %2221 = vmatprep.subr.bf16.mxu0 0
    %2222 = vmatpush1.bf16.msra.mxu0 0
    %2223 = vmatprep.subr.bf16.mxu0 0
    %2224 = vmatpush1.bf16.msra.mxu0 0
    %2225 = vmatprep.subr.bf16.mxu0 0
    %2226 = vmatpush1.bf16.msra.mxu0 0
    %2227 = vmatprep.subr.bf16.mxu0 0
    %2228 = vmatpush1.bf16.msra.mxu0 0
    %2229 = vmatprep.subr.bf16.mxu0 0
    %2230 = vmatpush1.bf16.msra.mxu0 0
    %2231 = vmatprep.subr.bf16.mxu0 0
    %2232 = vmatpush1.bf16.msra.mxu0 0
    %2233 = vmatprep.subr.bf16.mxu0 0
    %2234 = vmatpush1.bf16.msra.mxu0 0
    %2235 = vmatprep.subr.bf16.mxu0 0
    %2236 = vmatpush1.bf16.msra.mxu0 0
    %2237 = vmatprep.subr.bf16.mxu0 0
    %2238 = vmatpush1.bf16.msra.mxu0 0
    %2239 = vmatprep.subr.bf16.mxu0 0
    %2240 = vmatpush1.bf16.msra.mxu0 0
    %2241 = vmatprep.subr.bf16.mxu0 0
    %2242 = vmatpush1.bf16.msra.mxu0 0
    %2243 = vmatprep.subr.bf16.mxu0 0
    %2244 = vmatpush1.bf16.msra.mxu0 0
    %2245 = vmatprep.subr.bf16.mxu0 0
    %2246 = vmatpush1.bf16.msra.mxu0 0
    %2247 = vmatprep.subr.bf16.mxu0 0
    %2248 = vmatpush1.bf16.msra.mxu0 0
    %2249 = vmatprep.subr.bf16.mxu0 0
    %2250 = vmatpush1.bf16.msra.mxu0 0
    %2251 = vmatprep.mubr.bf16.mxu0 0
    %2252 = vmatmul.mubr.bf16.gmra.mrb[0].mxu0 %v2211
    %v2253 = vpop.f32.mrb[0].mxu0
    %v2254 = vadd.f32 0.0, %v2253
    %v2255 = vpop.f32.mrb[0].mxu0
    %v2256 = vpop.f32.mrb[0].mxu0
    %v2257 = vadd.f32 0.0, %v2256
    %v2258 = vpop.f32.mrb[0].mxu0
    %2259 = vmatprep.mubr.bf16.mxu0 0
    %2260 = vmatmul.mubr.bf16.gmra.mrb[0].mxu0 %v2214
    %v2261 = vpop.f32.mrb[0].mxu0
    %v2262 = vadd.f32 0.0, %v2261
    %v2263 = vpop.f32.mrb[0].mxu0
    %v2264 = vpop.f32.mrb[0].mxu0
    %v2265 = vadd.f32 0.0, %v2264
    %v2266 = vpop.f32.mrb[0].mxu0
    %2267 = vmatprep.mubr.bf16.mxu0 0
    %2268 = vmatmul.mubr.bf16.gmra.mrb[0].mxu0 %v2217
    %v2269 = vpop.f32.mrb[0].mxu0
    %v2270 = vadd.f32 0.0, %v2269
    %v2271 = vpop.f32.mrb[0].mxu0
    %v2272 = vpop.f32.mrb[0].mxu0
    %v2273 = vpop.f32.mrb[0].mxu0
    %2274 = vdwg.mxu0
    %v2280 = vunpack.c.l.b16 %v2187
    %v2281 = vunpack.c.l.b16 %v2188
    %v2282 = vunpack.c.l.b16 %v2189
    %v2283 = vunpack.c.l.b16 %v2190
    %v2284 = vunpack.c.l.b16 %v2191
    %v2285 = vpack.c.b16 %v2281, %v2280
    %v2286 = vpack.c.b16 %v2283, %v2282
    %v2287 = vpack.c.b16 %v2284, %v2284
    %v2289 = vsel %vm68, %v2285, 0
    %v2292 = vsel %vm68, %v2286, 0
    %v2295 = vsel %vm68, %v2287, 0
    %2297 = vmatprep.subr.bf16.mxu0 0
    %2298 = vmatpush1.bf16.msra.mxu0 %v161
    %2299 = vmatprep.subr.bf16.mxu0 0
    %2300 = vmatpush1.bf16.msra.mxu0 0
    %2301 = vmatprep.subr.bf16.mxu0 0
    %2302 = vmatpush1.bf16.msra.mxu0 0
    %2303 = vmatprep.subr.bf16.mxu0 0
    %2304 = vmatpush1.bf16.msra.mxu0 0
    %2305 = vmatprep.subr.bf16.mxu0 0
    %2306 = vmatpush1.bf16.msra.mxu0 0
    %2307 = vmatprep.subr.bf16.mxu0 0
    %2308 = vmatpush1.bf16.msra.mxu0 0
    %2309 = vmatprep.subr.bf16.mxu0 0
    %2310 = vmatpush1.bf16.msra.mxu0 0
    %2311 = vmatprep.subr.bf16.mxu0 0
    %2312 = vmatpush1.bf16.msra.mxu0 0
    %2313 = vmatprep.subr.bf16.mxu0 0
    %2314 = vmatpush1.bf16.msra.mxu0 0
    %2315 = vmatprep.subr.bf16.mxu0 0
    %2316 = vmatpush1.bf16.msra.mxu0 0
    %2317 = vmatprep.subr.bf16.mxu0 0
    %2318 = vmatpush1.bf16.msra.mxu0 0
    %2319 = vmatprep.subr.bf16.mxu0 0
    %2320 = vmatpush1.bf16.msra.mxu0 0
    %2321 = vmatprep.subr.bf16.mxu0 0
    %2322 = vmatpush1.bf16.msra.mxu0 0
    %2323 = vmatprep.subr.bf16.mxu0 0
    %2324 = vmatpush1.bf16.msra.mxu0 0
    %2325 = vmatprep.subr.bf16.mxu0 0
    %2326 = vmatpush1.bf16.msra.mxu0 0
    %2327 = vmatprep.subr.bf16.mxu0 0
    %2328 = vmatpush1.bf16.msra.mxu0 0
    %2329 = vmatprep.mubr.bf16.mxu0 0
    %2330 = vmatmul.mubr.bf16.gmra.mrb[0].mxu0 %v2289
    %v2331 = vpop.f32.mrb[0].mxu0
    %v2332 = vadd.f32 %v2254, %v2331
    %v2333 = vpop.f32.mrb[0].mxu0
    %v2334 = vpop.f32.mrb[0].mxu0
    %v2335 = vadd.f32 %v2257, %v2334
    %v2336 = vpop.f32.mrb[0].mxu0
    %2337 = vmatprep.mubr.bf16.mxu0 0
    %2338 = vmatmul.mubr.bf16.gmra.mrb[0].mxu0 %v2292
    %v2339 = vpop.f32.mrb[0].mxu0
    %v2340 = vadd.f32 %v2262, %v2339
    %v2341 = vpop.f32.mrb[0].mxu0
    %v2342 = vpop.f32.mrb[0].mxu0
    %v2343 = vadd.f32 %v2265, %v2342
    %v2344 = vpop.f32.mrb[0].mxu0
    %2345 = vmatprep.mubr.bf16.mxu0 0
    %2346 = vmatmul.mubr.bf16.gmra.mrb[0].mxu0 %v2295
    %v2347 = vpop.f32.mrb[0].mxu0
    %v2348 = vadd.f32 %v2270, %v2347
    %v2349 = vpop.f32.mrb[0].mxu0
    %v2350 = vpop.f32.mrb[0].mxu0
    %v2351 = vpop.f32.mrb[0].mxu0
    %2352 = vdwg.mxu0
    %v2353 = vadd.f32 %v2332, %v223
    %v2354 = vadd.f32 %v2335, %v223
    %v2355 = vadd.f32 %v2340, %v223
    %v2356 = vadd.f32 %v2343, %v223
    %v2357 = vadd.f32 %v2348, %v223
    %v2358 = vmax.f32 %v2353, 0.0
    %v2359 = vmax.f32 %v2354, 0.0
    %v2360 = vmax.f32 %v2355, 0.0
    %v2361 = vmax.f32 %v2356, 0.0
    %v2362 = vmax.f32 %v2357, 0.0
    %v2363 = vpack.c.bf16 %v2359, %v2358
    %v2364 = vpack.c.bf16 %v2361, %v2360
    %v2365 = vpack.c.bf16 %v2362, %v2362
    %v2367 = vsel %vm277, %v2363, 0
    %v2370 = vsel %vm277, %v2364, 0
    %v2373 = vsel %vm277, %v2365, 0
    %2375 = vmatprep.subr.bf16.mxu0 0
    %2376 = vmatpush1.bf16.msra.mxu0 %v269
    %2377 = vmatprep.subr.bf16.mxu0 0
    %2378 = vmatpush1.bf16.msra.mxu0 %v270
    %2379 = vmatprep.subr.bf16.mxu0 0
    %2380 = vmatpush1.bf16.msra.mxu0 %v271
    %2381 = vmatprep.subr.bf16.mxu0 0
    %2382 = vmatpush1.bf16.msra.mxu0 %v272
    %2383 = vmatprep.subr.bf16.mxu0 0
    %2384 = vmatpush1.bf16.msra.mxu0 0
    %2385 = vmatprep.subr.bf16.mxu0 0
    %2386 = vmatpush1.bf16.msra.mxu0 0
    %2387 = vmatprep.subr.bf16.mxu0 0
    %2388 = vmatpush1.bf16.msra.mxu0 0
    %2389 = vmatprep.subr.bf16.mxu0 0
    %2390 = vmatpush1.bf16.msra.mxu0 0
    %2391 = vmatprep.subr.bf16.mxu0 0
    %2392 = vmatpush1.bf16.msra.mxu0 0
    %2393 = vmatprep.subr.bf16.mxu0 0
    %2394 = vmatpush1.bf16.msra.mxu0 0
    %2395 = vmatprep.subr.bf16.mxu0 0
    %2396 = vmatpush1.bf16.msra.mxu0 0
    %2397 = vmatprep.subr.bf16.mxu0 0
    %2398 = vmatpush1.bf16.msra.mxu0 0
    %2399 = vmatprep.subr.bf16.mxu0 0
    %2400 = vmatpush1.bf16.msra.mxu0 0
    %2401 = vmatprep.subr.bf16.mxu0 0
    %2402 = vmatpush1.bf16.msra.mxu0 0
    %2403 = vmatprep.subr.bf16.mxu0 0
    %2404 = vmatpush1.bf16.msra.mxu0 0
    %2405 = vmatprep.subr.bf16.mxu0 0
    %2406 = vmatpush1.bf16.msra.mxu0 0
    %2407 = vmatprep.mubr.bf16.mxu0 0
    %2408 = vmatmul.mubr.bf16.gmra.mrb[0].mxu0 %v2367
    %v2409 = vpop.f32.mrb[0].mxu0
    %v2410 = vadd.f32 %v251, %v2409
    %v2411 = vpop.f32.mrb[0].mxu0
    %v2412 = vpop.f32.mrb[0].mxu0
    %v2413 = vadd.f32 %v251, %v2412
    %v2414 = vpop.f32.mrb[0].mxu0
    %2415 = vmatprep.mubr.bf16.mxu0 0
    %2416 = vmatmul.mubr.bf16.gmra.mrb[0].mxu0 %v2370
    %v2417 = vpop.f32.mrb[0].mxu0
    %v2418 = vadd.f32 %v251, %v2417
    %v2419 = vpop.f32.mrb[0].mxu0
    %v2420 = vpop.f32.mrb[0].mxu0
    %v2421 = vadd.f32 %v251, %v2420
    %v2422 = vpop.f32.mrb[0].mxu0
    %2423 = vmatprep.mubr.bf16.mxu0 0
    %2424 = vmatmul.mubr.bf16.gmra.mrb[0].mxu0 %v2373
    %v2425 = vpop.f32.mrb[0].mxu0
    %v2426 = vadd.f32 %v251, %v2425
    %v2427 = vpop.f32.mrb[0].mxu0
    %v2428 = vpop.f32.mrb[0].mxu0
    %v2429 = vpop.f32.mrb[0].mxu0
    %2430 = vdwg.mxu0
    %v2431 = vmax.f32 %v2410, 0.0
    %v2432 = vmax.f32 %v2413, 0.0
    %v2433 = vmax.f32 %v2418, 0.0
    %v2434 = vmax.f32 %v2421, 0.0
    %v2435 = vmax.f32 %v2426, 0.0
    %vm2436 = vcmp.gt.s32.totalorder %v37, 7
    %vm2437 = vcmp.gt.s32.totalorder %v38, 7
    %vm2438 = vcmp.gt.s32.totalorder %v39, 7
    %vm2439 = vcmp.gt.s32.totalorder %v40, 7
    %vm2440 = vcmp.gt.s32.totalorder %v41, 7
    %v2441 = vsel %vm2436, 1, 0
    %v2442 = vsel %vm2437, 1, 0
    %v2443 = vsel %vm2438, 1, 0
    %v2444 = vsel %vm2439, 1, 0
    %v2445 = vsel %vm2440, 1, 0
    %v2446 = vcvt.s32.f32 %v2441
    %v2447 = vcvt.s32.f32 %v2442
    %v2448 = vcvt.s32.f32 %v2443
    %v2449 = vcvt.s32.f32 %v2444
    %v2450 = vcvt.s32.f32 %v2445
    %2452 = vset.pattern.permute.xlu0 0
    %2453 = vperm.xlu0 %2452, %v2446
    %v2454 = vpop.permute.xlu0 %2453
    %2457 = vset.pattern.permute.xlu0 0
    %2458 = vperm.xlu0 %2457, %v2447
    %v2459 = vpop.permute.xlu0 %2458
    %2462 = vset.pattern.permute.xlu0 0
    %2463 = vperm.xlu0 %2462, %v2448
    %v2464 = vpop.permute.xlu0 %2463
    %2467 = vset.pattern.permute.xlu0 0
    %2468 = vperm.xlu0 %2467, %v2449
    %v2469 = vpop.permute.xlu0 %2468
    %2472 = vset.pattern.permute.xlu0 0
    %2473 = vperm.xlu0 %2472, %v2450
    %v2474 = vpop.permute.xlu0 %2473
    %v2476 = vmul.f32 %v2431, %v2454
    %v2477 = vmul.f32 %v2432, %v2459
    %v2478 = vmul.f32 %v2433, %v2464
    %v2479 = vmul.f32 %v2434, %v2469
    %v2480 = vmul.f32 %v2435, %v2474
    %v2481 = vmax.f32 %v2182, %v2476
    %v2482 = vmax.f32 %v2183, %v2477
    %v2483 = vmax.f32 %v2184, %v2478
    %v2484 = vmax.f32 %v2185, %v2479
    %v2485 = vmax.f32 %v2186, %v2480
    %v2486 = vpack.c.bf16 %v2482, %v2481
    %v2487 = vpack.c.bf16 %v2484, %v2483
    %v2488 = vpack.c.bf16 %v2485, %v2485
    %v2489 = vld [vmem:[%s8] sm:$0xf]
    %v2490 = vld [vmem:[%s8 + $0x4] sm:$0xf]
    %v2491 = vld [vmem:[%s8 + $0x8] sm:$0xf]
    %v2492 = vld [vmem:[%s8 + $0xc] sm:$0xf]
    %v2493 = vld [vmem:[%s8 + $0x10] sm:$0xf]
    %v2494 = vld [vmem:[%s8 + $0x14] sm:$0xf]
    %v2495 = vld [vmem:[%s8 + $0x18] sm:$0xf]
    %v2496 = vld [vmem:[%s8 + $0x1c] sm:$0xf]
    %v2497 = vld [vmem:[%s9] sm:$0x1]
    %v2499 = vlaneseq
    %v2500 = vshrl.u32 %v2499, 7
    %v2501 = vsub.s32 0, %v2500
    %v2502 = vrot.slane %v2497, %v2501
    %v2512 = vunpack.c.l.b16 %v2489
    %v2513 = vunpack.c.l.b16 %v2490
    %v2514 = vunpack.c.l.b16 %v2491
    %v2515 = vunpack.c.l.b16 %v2492
    %v2516 = vunpack.c.l.b16 %v2493
    %v2517 = vunpack.c.l.b16 %v2494
    %v2518 = vunpack.c.l.b16 %v2495
    %v2519 = vunpack.c.l.b16 %v2496
    %v2520 = vpack.c.b16 %v2513, %v2512
    %v2521 = vpack.c.b16 %v2515, %v2514
    %v2522 = vpack.c.b16 %v2517, %v2516
    %v2523 = vpack.c.b16 %v2519, %v2518
    %v2529 = vsel %vm277, %v2486, 0
    %v2532 = vsel %vm277, %v2487, 0
    %v2535 = vsel %vm277, %v2488, 0
    %2537 = vmatprep.subr.bf16.mxu0 0
    %2538 = vmatpush1.bf16.msra.mxu0 %v2520
    %2539 = vmatprep.subr.bf16.mxu0 0
    %2540 = vmatpush1.bf16.msra.mxu0 %v2521
    %2541 = vmatprep.subr.bf16.mxu0 0
    %2542 = vmatpush1.bf16.msra.mxu0 %v2522
    %2543 = vmatprep.subr.bf16.mxu0 0
    %2544 = vmatpush1.bf16.msra.mxu0 %v2523
    %2545 = vmatprep.subr.bf16.mxu0 0
    %2546 = vmatpush1.bf16.msra.mxu0 0
    %2547 = vmatprep.subr.bf16.mxu0 0
    %2548 = vmatpush1.bf16.msra.mxu0 0
    %2549 = vmatprep.subr.bf16.mxu0 0
    %2550 = vmatpush1.bf16.msra.mxu0 0
    %2551 = vmatprep.subr.bf16.mxu0 0
    %2552 = vmatpush1.bf16.msra.mxu0 0
    %2553 = vmatprep.subr.bf16.mxu0 0
    %2554 = vmatpush1.bf16.msra.mxu0 0
    %2555 = vmatprep.subr.bf16.mxu0 0
    %2556 = vmatpush1.bf16.msra.mxu0 0
    %2557 = vmatprep.subr.bf16.mxu0 0
    %2558 = vmatpush1.bf16.msra.mxu0 0
    %2559 = vmatprep.subr.bf16.mxu0 0
    %2560 = vmatpush1.bf16.msra.mxu0 0
    %2561 = vmatprep.subr.bf16.mxu0 0
    %2562 = vmatpush1.bf16.msra.mxu0 0
    %2563 = vmatprep.subr.bf16.mxu0 0
    %2564 = vmatpush1.bf16.msra.mxu0 0
    %2565 = vmatprep.subr.bf16.mxu0 0
    %2566 = vmatpush1.bf16.msra.mxu0 0
    %2567 = vmatprep.subr.bf16.mxu0 0
    %2568 = vmatpush1.bf16.msra.mxu0 0
    %2569 = vmatprep.mubr.bf16.mxu0 0
    %2570 = vmatmul.mubr.bf16.gmra.mrb[0].mxu0 %v2529
    %v2571 = vpop.f32.mrb[0].mxu0
    %v2572 = vadd.f32 %v2502, %v2571
    %v2573 = vpop.f32.mrb[0].mxu0
    %v2574 = vpop.f32.mrb[0].mxu0
    %v2575 = vadd.f32 %v2502, %v2574
    %v2576 = vpop.f32.mrb[0].mxu0
    %2577 = vmatprep.mubr.bf16.mxu0 0
    %2578 = vmatmul.mubr.bf16.gmra.mrb[0].mxu0 %v2532
    %v2579 = vpop.f32.mrb[0].mxu0
    %v2580 = vadd.f32 %v2502, %v2579
    %v2581 = vpop.f32.mrb[0].mxu0
    %v2582 = vpop.f32.mrb[0].mxu0
    %v2583 = vadd.f32 %v2502, %v2582
    %v2584 = vpop.f32.mrb[0].mxu0
    %2585 = vmatprep.mubr.bf16.mxu0 0
    %2586 = vmatmul.mubr.bf16.gmra.mrb[0].mxu0 %v2535
    %v2587 = vpop.f32.mrb[0].mxu0
    %v2588 = vadd.f32 %v2502, %v2587
    %v2589 = vpop.f32.mrb[0].mxu0
    %v2590 = vpop.f32.mrb[0].mxu0
    %v2591 = vpop.f32.mrb[0].mxu0
    %2592 = vdwg.mxu0
    %v2593 = vmax.f32 %v2572, 0.0
    %v2594 = vmax.f32 %v2575, 0.0
    %v2595 = vmax.f32 %v2580, 0.0
    %v2596 = vmax.f32 %v2583, 0.0
    %v2597 = vmax.f32 %v2588, 0.0
    %2598 = vst.msk [vmem:[#allocation2] sm:$0xff] %vm277, %v2593
    %2599 = vst.msk [vmem:[#allocation2 + $0x8] sm:$0xff] %vm277, %v2594
    %2600 = vst.msk [vmem:[#allocation2 + $0x10] sm:$0xff] %vm277, %v2595
    %2601 = vst.msk [vmem:[#allocation2 + $0x18] sm:$0xff] %vm277, %v2596
    %2602 = vst.msk [vmem:[#allocation2 + $0x20] sm:$0xff] %vm277, %v2597
    // Predicated region
    $region42: #{tpu_custom_call.1} parent=1 // pred_check
      _
    $region43: #{tpu_custom_call.1} parent=1 // pred_check_branch
      %2604 = sbr.rel (0) target = $region45
    $region44: #{tpu_custom_call.1} parent=1 // pred_region
      %s2606 = ssub.s32 640, 640
      %2607 = vsyncadd [#allocation3], %s2606
      %s2608 = sshll.u32 [#allocation2], 4
      %s2609 = int_to_ptr.vmem [resolvable:$true] %s2608
      %2614 = dma.vmem_to_hbm [thread:$0]  %s2609, 640, %s10, [#allocation3], 128, 128, 8
    $region45: #{tpu_custom_call.1} parent=1 // pred_fallthru
      _
    // Predicated region
    $region46: #{tpu_custom_call.1} parent=1 // pred_check
      _
    $region47: #{tpu_custom_call.1} parent=1 // pred_check_branch
      %2616 = sbr.rel (0) target = $region49
    $region48: #{tpu_custom_call.1} parent=1 // pred_region
      %2617 = dma.done [#allocation3], 640
    $region49: #{tpu_custom_call.1} parent=1 // pred_fallthru
      _
    %2618 = vsyncpa [#allocation3], 1

</llo_original>
